<compile_context>
chip_gen: v7x
topology: tpu7x:2x2x1
jax: 0.10.0
libtpu: 0.0.40
codegen_flags: <defaults>
</compile_context>

<pallas_src>
import functools

import jax
import jax.numpy as jnp
import numpy as np
from jax import lax
from jax.experimental import pallas as pl
from jax.experimental.pallas import tpu as pltpu


# ------------------------------ fused kernel ------------------------------- #

def _fire_kernel(x_ref, wsq_ref, bsq_ref, wcomb_ref, bcomb_ref, masks_ref,
                 o_ref, pad_ref, col_ref,
                 *, W, HW, DHW, Csq, PAD, use_bypass):
    # ---- squeeze 1x1x1 conv (BN scale folded into weight) + bias + ReLU ----
    x2 = x_ref[0]                                        # (Cin, DHW) f32
    sq = jnp.dot(wsq_ref[...], x2.astype(jnp.bfloat16),
                 preferred_element_type=jnp.float32)     # (Csq, DHW)
    sq = jnp.maximum(sq + bsq_ref[...], 0.0)

    # ---- flat zero-padded copy of sq (only the two pad strips are zeroed;
    #      the interior is fully overwritten every grid step) ---------------
    pad_ref[:, :PAD] = jnp.zeros((Csq, PAD), jnp.float32)
    pad_ref[:, PAD + DHW:] = jnp.zeros((Csq, PAD), jnp.float32)
    pad_ref[:, PAD:PAD + DHW] = sq

    # ---- im2col: 27 statically shifted lane windows, border-masked --------
    for kd in range(3):
        for kh in range(3):
            for kw in range(3):
                t = (kd * 3 + kh) * 3 + kw
                off = (kd - 1) * HW + (kh - 1) * W + (kw - 1)
                shifted = pad_ref[:, PAD + off:PAD + off + DHW]   # (Csq, DHW)
                col_ref[t * Csq:(t + 1) * Csq, :] = (
                    shifted * masks_ref[t:t + 1, :])

    # ---- fused expand1x1 + expand3x3: ONE deep-K MXU matmul ----------------
    out = jnp.dot(wcomb_ref[...], col_ref[...].astype(jnp.bfloat16),
                  preferred_element_type=jnp.float32)    # (Ctot, DHW)
    out = out + bcomb_ref[...]
    if use_bypass:
        out = out + x2
    o_ref[0] = jnp.maximum(out, 0.0)                     # lane-dense store


# ------------------------------ Fire module -------------------------------- #

def fold_bn(conv_bias, gamma, beta, mean, var, eps=1e-5):
    # BN(conv(x)+b) == conv(x)*s + ((b-mean)*s + beta),  s = gamma/sqrt(var+eps)
    s = gamma / jnp.sqrt(var + eps)
    return s, (conv_bias - mean) * s + beta


def fire_forward(x_ncdhw, p, *, use_bypass):
    N, Cin, D, H, W = x_ncdhw.shape
    Csq = p["sq_w"].shape[1]
    Ce1 = p["e1_w"].shape[1]
    Ce3 = p["e3_w"].shape[-1]
    Ctot = Ce1 + Ce3
    if use_bypass:
        assert Ctot == Cin, "bypass requires expand1x1+expand3x3 == inplanes"

    HW, DHW = H * W, D * H * W
    PAD = ((HW + W + 1 + 127) // 128) * 128    # halo pad (>= max tap offset)

    # NCDHW -> (N, Cin, DHW): pure reshape, no HBM transpose.
    x = x_ncdhw.reshape(N, Cin, DHW)

    # Fold eval-mode BN scale into the conv weights; keep bias separate.
    s_sq, b_sq = fold_bn(p["sq_b"], *p["sq_bn"])
    s_e1, b_e1 = fold_bn(p["e1_b"], *p["e1_bn"])
    s_e3, b_e3 = fold_bn(p["e3_b"], *p["e3_bn"])

    wsq = (p["sq_w"].T * s_sq[:, None]).astype(jnp.bfloat16)        # (Csq,Cin)
    we1 = p["e1_w"].T * s_e1[:, None]                               # (Ce1,Csq)
    we3 = p["e3_w"].reshape(27 * Csq, Ce3).T * s_e3[:, None]        # (Ce3,27Csq)

    # expand1x1 folded into the centre tap (t=13) of the 3x3x3 weight.
    wcomb = jnp.zeros((Ctot, 27 * Csq), jnp.float32)
    wcomb = wcomb.at[:Ce1, 13 * Csq:14 * Csq].set(we1)
    wcomb = wcomb.at[Ce1:, :].set(we3)
    wcomb = wcomb.astype(jnp.bfloat16)
    bcomb = jnp.concatenate([b_e1, b_e3]).reshape(Ctot, 1)

    # Border-validity masks (0/1 f32) for the 27 taps, indexed by output pos.
    dd = np.arange(D).reshape(D, 1, 1)
    hh = np.arange(H).reshape(1, H, 1)
    ww = np.arange(W).reshape(1, 1, W)
    m = []
    for kd in range(3):
        for kh in range(3):
            for kw in range(3):
                ok = ((0 <= dd + kd - 1) & (dd + kd - 1 < D)
                      & (0 <= hh + kh - 1) & (hh + kh - 1 < H)
                      & (0 <= ww + kw - 1) & (ww + kw - 1 < W))
                m.append(ok.reshape(-1))
    masks = jnp.asarray(np.stack(m).astype(np.float32))             # (27,DHW)

    kernel = functools.partial(_fire_kernel, W=W, HW=HW, DHW=DHW, Csq=Csq,
                               PAD=PAD, use_bypass=use_bypass)

    out = pl.pallas_call(
        kernel,
        out_shape=jax.ShapeDtypeStruct((N, Ctot, DHW), jnp.float32),
        grid=(N,),
        in_specs=[
            pl.BlockSpec((1, Cin, DHW), lambda n: (n, 0, 0)),
            pl.BlockSpec((Csq, Cin), lambda n: (0, 0)),
            pl.BlockSpec((Csq, 1), lambda n: (0, 0)),
            pl.BlockSpec((Ctot, 27 * Csq), lambda n: (0, 0)),
            pl.BlockSpec((Ctot, 1), lambda n: (0, 0)),
            pl.BlockSpec((27, DHW), lambda n: (0, 0)),
        ],
        out_specs=pl.BlockSpec((1, Ctot, DHW), lambda n: (n, 0, 0)),
        scratch_shapes=[
            pltpu.VMEM((Csq, PAD + DHW + PAD), jnp.float32),   # flat halo
            pltpu.VMEM((27 * Csq, DHW), jnp.float32),          # im2col
        ],
        compiler_params=pltpu.CompilerParams(
            dimension_semantics=("parallel",)),
    )(x, wsq, b_sq.reshape(Csq, 1), wcomb, bcomb, masks)

    return out.reshape(N, Ctot, D, H, W)     # already NCDHW — no transpose


# ---------------------- params & pure-JAX reference ------------------------ #

def init_params(key, Cin, Csq, Ce1, Ce3):
    ks = jax.random.split(key, 9)

    def bn_params(k, C):
        k1, k2, k3, k4 = jax.random.split(k, 4)
        gamma = 1.0 + 0.1 * jax.random.normal(k1, (C,), jnp.float32)
        beta = 0.1 * jax.random.normal(k2, (C,), jnp.float32)
        mean = 0.1 * jax.random.normal(k3, (C,), jnp.float32)
        var = 1.0 + 0.1 * jax.random.uniform(k4, (C,), jnp.float32)
        return gamma, beta, mean, var

    return dict(
        sq_w=0.1 * jax.random.normal(ks[0], (Cin, Csq), jnp.float32),
        sq_b=0.1 * jax.random.normal(ks[1], (Csq,), jnp.float32),
        sq_bn=bn_params(ks[2], Csq),
        e1_w=0.1 * jax.random.normal(ks[3], (Csq, Ce1), jnp.float32),
        e1_b=0.1 * jax.random.normal(ks[4], (Ce1,), jnp.float32),
        e1_bn=bn_params(ks[5], Ce1),
        e3_w=0.1 * jax.random.normal(ks[6], (3, 3, 3, Csq, Ce3), jnp.float32),
        e3_b=0.1 * jax.random.normal(ks[7], (Ce3,), jnp.float32),
        e3_bn=bn_params(ks[8], Ce3),
    )


def reference(x_ncdhw, p, *, use_bypass):
    x = jnp.transpose(x_ncdhw, (0, 2, 3, 4, 1)).astype(jnp.float32)
    sc, bi = fold_bn(p["sq_b"], *p["sq_bn"])
    s = jnp.maximum(jnp.einsum("ndhwc,co->ndhwo", x, p["sq_w"]) * sc + bi, 0.0)
    sc1, bi1 = fold_bn(p["e1_b"], *p["e1_bn"])
    o1 = jnp.einsum("ndhwc,co->ndhwo", s, p["e1_w"]) * sc1 + bi1
    sc3, bi3 = fold_bn(p["e3_b"], *p["e3_bn"])
    o2 = lax.conv_general_dilated(
        s, p["e3_w"], window_strides=(1, 1, 1), padding="SAME",
        dimension_numbers=("NDHWC", "DHWIO", "NDHWC")) * sc3 + bi3
    y = jnp.concatenate([o1, o2], axis=-1)
    if use_bypass:
        y = y + x
    y = jnp.maximum(y, 0.0)
    return jnp.transpose(y, (0, 4, 1, 2, 3))


# --------------------------------- main ------------------------------------ #

if __name__ == "__main__":
    N, Cin, D, H, W = 2, 32, 4, 8, 8
    Csq, Ce1, Ce3 = 8, 16, 16
    use_bypass = True      # valid: Ce1 + Ce3 == Cin

    key = jax.random.PRNGKey(0)
    kx, kp = jax.random.split(key)
    x = jax.random.normal(kx, (N, Cin, D, H, W), jnp.float32)
    params = init_params(kp, Cin, Csq, Ce1, Ce3)

    fwd = jax.jit(functools.partial(fire_forward, use_bypass=use_bypass))
    out = jax.block_until_ready(fwd(x, params))
    assert out.shape == (N, Ce1 + Ce3, D, H, W)

    ref = reference(x, params, use_bypass=use_bypass)
    # bf16 MXU operands (with BN scales folded in) vs. a pure-f32 reference.
    np.testing.assert_allclose(np.asarray(out), np.asarray(ref),
                               rtol=2e-2, atol=3e-2)
    print("KERNEL_OK")
</pallas_src>

<mosaic_0001>
module attributes {stable_mosaic.version = 11 : i64} {
  func.func @_fire_kernel(%arg0: i32, %arg1: memref<1x32x256xf32, #tpu.memory_space<vmem>>, %arg2: memref<8x32xbf16, #tpu.memory_space<vmem>>, %arg3: memref<8x1xf32, #tpu.memory_space<vmem>>, %arg4: memref<32x216xbf16, #tpu.memory_space<vmem>>, %arg5: memref<32x1xf32, #tpu.memory_space<vmem>>, %arg6: memref<27x256xf32, #tpu.memory_space<vmem>>, %arg7: memref<1x32x256xf32, #tpu.memory_space<vmem>>, %arg8: memref<8x512xf32, #tpu.memory_space<vmem>>, %arg9: memref<216x256xf32, #tpu.memory_space<vmem>>) attributes {dimension_semantics = [#tpu.dimension_semantics<parallel>], iteration_bounds = array<i64: 2>, scalar_prefetch = 0 : i64, scratch_operands = 2 : i64, tpu.core_type = #tpu.core_type<tc>, window_params = [{transform_indices = @transform_0, window_bounds = array<i64: 1, 32, 256>}, {pipeline_mode = #tpu.pipeline_mode<synchronous>, transform_indices = @transform_1, window_bounds = array<i64: 8, 32>}, {pipeline_mode = #tpu.pipeline_mode<synchronous>, transform_indices = @transform_2, window_bounds = array<i64: 8, 1>}, {pipeline_mode = #tpu.pipeline_mode<synchronous>, transform_indices = @transform_3, window_bounds = array<i64: 32, 216>}, {pipeline_mode = #tpu.pipeline_mode<synchronous>, transform_indices = @transform_4, window_bounds = array<i64: 32, 1>}, {pipeline_mode = #tpu.pipeline_mode<synchronous>, transform_indices = @transform_5, window_bounds = array<i64: 27, 256>}, {transform_indices = @transform_6, window_bounds = array<i64: 1, 32, 256>}]} {
    %c0 = arith.constant 0 : index
    %c0_0 = arith.constant 0 : index
    %c0_1 = arith.constant 0 : index
    %0 = vector.load %arg1[%c0, %c0_0, %c0_1] : memref<1x32x256xf32, #tpu.memory_space<vmem>>, vector<1x32x256xf32>
    %1 = vector.shape_cast %0 : vector<1x32x256xf32> to vector<32x256xf32>
    %c0_2 = arith.constant 0 : index
    %c0_3 = arith.constant 0 : index
    %2 = vector.load %arg2[%c0_2, %c0_3] : memref<8x32xbf16, #tpu.memory_space<vmem>>, vector<8x32xbf16>
    %3 = arith.truncf %1 : vector<32x256xf32> to vector<32x256xbf16>
    %cst = arith.constant dense<0.000000e+00> : vector<8x256xf32>
    %4 = tpu.matmul %2, %3, %cst {dimension_numbers = #tpu.dot_dimension_numbers<[1], [0], [0], [1], [0, 0, 1, 1], [], []>} : vector<8x32xbf16>, vector<32x256xbf16>, vector<8x256xf32> -> vector<8x256xf32>
    %c0_4 = arith.constant 0 : index
    %c0_5 = arith.constant 0 : index
    %5 = vector.load %arg3[%c0_4, %c0_5] : memref<8x1xf32, #tpu.memory_space<vmem>>, vector<8x1xf32>
    %6 = vector.broadcast %5 : vector<8x1xf32> to vector<8x256xf32>
    %7 = arith.addf %4, %6 : vector<8x256xf32>
    %cst_6 = arith.constant 0.000000e+00 : f32
    %8 = vector.broadcast %cst_6 : f32 to vector<8x256xf32>
    %9 = arith.maximumf %7, %8 : vector<8x256xf32>
    %cst_7 = arith.constant 0.000000e+00 : f32
    %10 = vector.broadcast %cst_7 : f32 to vector<8x128xf32>
    %c0_8 = arith.constant 0 : index
    %c0_9 = arith.constant 0 : index
    %11 = vector.load %arg8[%c0_8, %c0_9] : memref<8x512xf32, #tpu.memory_space<vmem>>, vector<8x128xf32>
    tpu.vector_store %arg8[%c0_8, %c0_9], %10 {strides = array<i32>} : memref<8x512xf32, #tpu.memory_space<vmem>>, vector<8x128xf32>,
    %cst_10 = arith.constant 0.000000e+00 : f32
    %12 = vector.broadcast %cst_10 : f32 to vector<8x128xf32>
    %c0_11 = arith.constant 0 : index
    %c384 = arith.constant 384 : index
    %13 = vector.load %arg8[%c0_11, %c384] : memref<8x512xf32, #tpu.memory_space<vmem>>, vector<8x128xf32>
    tpu.vector_store %arg8[%c0_11, %c384], %12 {strides = array<i32>} : memref<8x512xf32, #tpu.memory_space<vmem>>, vector<8x128xf32>,
    %c0_12 = arith.constant 0 : index
    %c128 = arith.constant 128 : index
    %14 = vector.load %arg8[%c0_12, %c128] : memref<8x512xf32, #tpu.memory_space<vmem>>, vector<8x256xf32>
    tpu.vector_store %arg8[%c0_12, %c128], %9 {strides = array<i32>} : memref<8x512xf32, #tpu.memory_space<vmem>>, vector<8x256xf32>,
    %c0_13 = arith.constant 0 : index
    %c55 = arith.constant 55 : index
    %15 = vector.load %arg8[%c0_13, %c55] : memref<8x512xf32, #tpu.memory_space<vmem>>, vector<8x256xf32>
    %c0_14 = arith.constant 0 : index
    %c0_15 = arith.constant 0 : index
    %16 = vector.load %arg6[%c0_14, %c0_15] : memref<27x256xf32, #tpu.memory_space<vmem>>, vector<1x256xf32>
    %17 = vector.broadcast %16 : vector<1x256xf32> to vector<8x256xf32>
    %18 = arith.mulf %15, %17 : vector<8x256xf32>
    %c0_16 = arith.constant 0 : index
    %c0_17 = arith.constant 0 : index
    %19 = vector.load %arg9[%c0_16, %c0_17] : memref<216x256xf32, #tpu.memory_space<vmem>>, vector<8x256xf32>
    tpu.vector_store %arg9[%c0_16, %c0_17], %18 {strides = array<i32>} : memref<216x256xf32, #tpu.memory_space<vmem>>, vector<8x256xf32>,
    %c0_18 = arith.constant 0 : index
    %c56 = arith.constant 56 : index
    %20 = vector.load %arg8[%c0_18, %c56] : memref<8x512xf32, #tpu.memory_space<vmem>>, vector<8x256xf32>
    %c1 = arith.constant 1 : index
    %c0_19 = arith.constant 0 : index
    %21 = vector.load %arg6[%c1, %c0_19] : memref<27x256xf32, #tpu.memory_space<vmem>>, vector<1x256xf32>
    %22 = vector.broadcast %21 : vector<1x256xf32> to vector<8x256xf32>
    %23 = arith.mulf %20, %22 : vector<8x256xf32>
    %c8 = arith.constant 8 : index
    %c0_20 = arith.constant 0 : index
    %24 = vector.load %arg9[%c8, %c0_20] : memref<216x256xf32, #tpu.memory_space<vmem>>, vector<8x256xf32>
    tpu.vector_store %arg9[%c8, %c0_20], %23 {strides = array<i32>} : memref<216x256xf32, #tpu.memory_space<vmem>>, vector<8x256xf32>,
    %c0_21 = arith.constant 0 : index
    %c57 = arith.constant 57 : index
    %25 = vector.load %arg8[%c0_21, %c57] : memref<8x512xf32, #tpu.memory_space<vmem>>, vector<8x256xf32>
    %c2 = arith.constant 2 : index
    %c0_22 = arith.constant 0 : index
    %26 = vector.load %arg6[%c2, %c0_22] : memref<27x256xf32, #tpu.memory_space<vmem>>, vector<1x256xf32>
    %27 = vector.broadcast %26 : vector<1x256xf32> to vector<8x256xf32>
    %28 = arith.mulf %25, %27 : vector<8x256xf32>
    %c16 = arith.constant 16 : index
    %c0_23 = arith.constant 0 : index
    %29 = vector.load %arg9[%c16, %c0_23] : memref<216x256xf32, #tpu.memory_space<vmem>>, vector<8x256xf32>
    tpu.vector_store %arg9[%c16, %c0_23], %28 {strides = array<i32>} : memref<216x256xf32, #tpu.memory_space<vmem>>, vector<8x256xf32>,
    %c0_24 = arith.constant 0 : index
    %c63 = arith.constant 63 : index
    %30 = vector.load %arg8[%c0_24, %c63] : memref<8x512xf32, #tpu.memory_space<vmem>>, vector<8x256xf32>
    %c3 = arith.constant 3 : index
    %c0_25 = arith.constant 0 : index
    %31 = vector.load %arg6[%c3, %c0_25] : memref<27x256xf32, #tpu.memory_space<vmem>>, vector<1x256xf32>
    %32 = vector.broadcast %31 : vector<1x256xf32> to vector<8x256xf32>
    %33 = arith.mulf %30, %32 : vector<8x256xf32>
    %c24 = arith.constant 24 : index
    %c0_26 = arith.constant 0 : index
    %34 = vector.load %arg9[%c24, %c0_26] : memref<216x256xf32, #tpu.memory_space<vmem>>, vector<8x256xf32>
    tpu.vector_store %arg9[%c24, %c0_26], %33 {strides = array<i32>} : memref<216x256xf32, #tpu.memory_space<vmem>>, vector<8x256xf32>,
    %c0_27 = arith.constant 0 : index
    %c64 = arith.constant 64 : index
    %35 = vector.load %arg8[%c0_27, %c64] : memref<8x512xf32, #tpu.memory_space<vmem>>, vector<8x256xf32>
    %c4 = arith.constant 4 : index
    %c0_28 = arith.constant 0 : index
    %36 = vector.load %arg6[%c4, %c0_28] : memref<27x256xf32, #tpu.memory_space<vmem>>, vector<1x256xf32>
    %37 = vector.broadcast %36 : vector<1x256xf32> to vector<8x256xf32>
    %38 = arith.mulf %35, %37 : vector<8x256xf32>
    %c32 = arith.constant 32 : index
    %c0_29 = arith.constant 0 : index
    %39 = vector.load %arg9[%c32, %c0_29] : memref<216x256xf32, #tpu.memory_space<vmem>>, vector<8x256xf32>
    tpu.vector_store %arg9[%c32, %c0_29], %38 {strides = array<i32>} : memref<216x256xf32, #tpu.memory_space<vmem>>, vector<8x256xf32>,
    %c0_30 = arith.constant 0 : index
    %c65 = arith.constant 65 : index
    %40 = vector.load %arg8[%c0_30, %c65] : memref<8x512xf32, #tpu.memory_space<vmem>>, vector<8x256xf32>
    %c5 = arith.constant 5 : index
    %c0_31 = arith.constant 0 : index
    %41 = vector.load %arg6[%c5, %c0_31] : memref<27x256xf32, #tpu.memory_space<vmem>>, vector<1x256xf32>
    %42 = vector.broadcast %41 : vector<1x256xf32> to vector<8x256xf32>
    %43 = arith.mulf %40, %42 : vector<8x256xf32>
    %c40 = arith.constant 40 : index
    %c0_32 = arith.constant 0 : index
    %44 = vector.load %arg9[%c40, %c0_32] : memref<216x256xf32, #tpu.memory_space<vmem>>, vector<8x256xf32>
    tpu.vector_store %arg9[%c40, %c0_32], %43 {strides = array<i32>} : memref<216x256xf32, #tpu.memory_space<vmem>>, vector<8x256xf32>,
    %c0_33 = arith.constant 0 : index
    %c71 = arith.constant 71 : index
    %45 = vector.load %arg8[%c0_33, %c71] : memref<8x512xf32, #tpu.memory_space<vmem>>, vector<8x256xf32>
    %c6 = arith.constant 6 : index
    %c0_34 = arith.constant 0 : index
    %46 = vector.load %arg6[%c6, %c0_34] : memref<27x256xf32, #tpu.memory_space<vmem>>, vector<1x256xf32>
    %47 = vector.broadcast %46 : vector<1x256xf32> to vector<8x256xf32>
    %48 = arith.mulf %45, %47 : vector<8x256xf32>
    %c48 = arith.constant 48 : index
    %c0_35 = arith.constant 0 : index
    %49 = vector.load %arg9[%c48, %c0_35] : memref<216x256xf32, #tpu.memory_space<vmem>>, vector<8x256xf32>
    tpu.vector_store %arg9[%c48, %c0_35], %48 {strides = array<i32>} : memref<216x256xf32, #tpu.memory_space<vmem>>, vector<8x256xf32>,
    %c0_36 = arith.constant 0 : index
    %c72 = arith.constant 72 : index
    %50 = vector.load %arg8[%c0_36, %c72] : memref<8x512xf32, #tpu.memory_space<vmem>>, vector<8x256xf32>
    %c7 = arith.constant 7 : index
    %c0_37 = arith.constant 0 : index
    %51 = vector.load %arg6[%c7, %c0_37] : memref<27x256xf32, #tpu.memory_space<vmem>>, vector<1x256xf32>
    %52 = vector.broadcast %51 : vector<1x256xf32> to vector<8x256xf32>
    %53 = arith.mulf %50, %52 : vector<8x256xf32>
    %c56_38 = arith.constant 56 : index
    %c0_39 = arith.constant 0 : index
    %54 = vector.load %arg9[%c56_38, %c0_39] : memref<216x256xf32, #tpu.memory_space<vmem>>, vector<8x256xf32>
    tpu.vector_store %arg9[%c56_38, %c0_39], %53 {strides = array<i32>} : memref<216x256xf32, #tpu.memory_space<vmem>>, vector<8x256xf32>,
    %c0_40 = arith.constant 0 : index
    %c73 = arith.constant 73 : index
    %55 = vector.load %arg8[%c0_40, %c73] : memref<8x512xf32, #tpu.memory_space<vmem>>, vector<8x256xf32>
    %c8_41 = arith.constant 8 : index
    %c0_42 = arith.constant 0 : index
    %56 = vector.load %arg6[%c8_41, %c0_42] : memref<27x256xf32, #tpu.memory_space<vmem>>, vector<1x256xf32>
    %57 = vector.broadcast %56 : vector<1x256xf32> to vector<8x256xf32>
    %58 = arith.mulf %55, %57 : vector<8x256xf32>
    %c64_43 = arith.constant 64 : index
    %c0_44 = arith.constant 0 : index
    %59 = vector.load %arg9[%c64_43, %c0_44] : memref<216x256xf32, #tpu.memory_space<vmem>>, vector<8x256xf32>
    tpu.vector_store %arg9[%c64_43, %c0_44], %58 {strides = array<i32>} : memref<216x256xf32, #tpu.memory_space<vmem>>, vector<8x256xf32>,
    %c0_45 = arith.constant 0 : index
    %c119 = arith.constant 119 : index
    %60 = vector.load %arg8[%c0_45, %c119] : memref<8x512xf32, #tpu.memory_space<vmem>>, vector<8x256xf32>
    %c9 = arith.constant 9 : index
    %c0_46 = arith.constant 0 : index
    %61 = vector.load %arg6[%c9, %c0_46] : memref<27x256xf32, #tpu.memory_space<vmem>>, vector<1x256xf32>
    %62 = vector.broadcast %61 : vector<1x256xf32> to vector<8x256xf32>
    %63 = arith.mulf %60, %62 : vector<8x256xf32>
    %c72_47 = arith.constant 72 : index
    %c0_48 = arith.constant 0 : index
    %64 = vector.load %arg9[%c72_47, %c0_48] : memref<216x256xf32, #tpu.memory_space<vmem>>, vector<8x256xf32>
    tpu.vector_store %arg9[%c72_47, %c0_48], %63 {strides = array<i32>} : memref<216x256xf32, #tpu.memory_space<vmem>>, vector<8x256xf32>,
    %c0_49 = arith.constant 0 : index
    %c120 = arith.constant 120 : index
    %65 = vector.load %arg8[%c0_49, %c120] : memref<8x512xf32, #tpu.memory_space<vmem>>, vector<8x256xf32>
    %c10 = arith.constant 10 : index
    %c0_50 = arith.constant 0 : index
    %66 = vector.load %arg6[%c10, %c0_50] : memref<27x256xf32, #tpu.memory_space<vmem>>, vector<1x256xf32>
    %67 = vector.broadcast %66 : vector<1x256xf32> to vector<8x256xf32>
    %68 = arith.mulf %65, %67 : vector<8x256xf32>
    %c80 = arith.constant 80 : index
    %c0_51 = arith.constant 0 : index
    %69 = vector.load %arg9[%c80, %c0_51] : memref<216x256xf32, #tpu.memory_space<vmem>>, vector<8x256xf32>
    tpu.vector_store %arg9[%c80, %c0_51], %68 {strides = array<i32>} : memref<216x256xf32, #tpu.memory_space<vmem>>, vector<8x256xf32>,
    %c0_52 = arith.constant 0 : index
    %c121 = arith.constant 121 : index
    %70 = vector.load %arg8[%c0_52, %c121] : memref<8x512xf32, #tpu.memory_space<vmem>>, vector<8x256xf32>
    %c11 = arith.constant 11 : index
    %c0_53 = arith.constant 0 : index
    %71 = vector.load %arg6[%c11, %c0_53] : memref<27x256xf32, #tpu.memory_space<vmem>>, vector<1x256xf32>
    %72 = vector.broadcast %71 : vector<1x256xf32> to vector<8x256xf32>
    %73 = arith.mulf %70, %72 : vector<8x256xf32>
    %c88 = arith.constant 88 : index
    %c0_54 = arith.constant 0 : index
    %74 = vector.load %arg9[%c88, %c0_54] : memref<216x256xf32, #tpu.memory_space<vmem>>, vector<8x256xf32>
    tpu.vector_store %arg9[%c88, %c0_54], %73 {strides = array<i32>} : memref<216x256xf32, #tpu.memory_space<vmem>>, vector<8x256xf32>,
    %c0_55 = arith.constant 0 : index
    %c127 = arith.constant 127 : index
    %75 = vector.load %arg8[%c0_55, %c127] : memref<8x512xf32, #tpu.memory_space<vmem>>, vector<8x256xf32>
    %c12 = arith.constant 12 : index
    %c0_56 = arith.constant 0 : index
    %76 = vector.load %arg6[%c12, %c0_56] : memref<27x256xf32, #tpu.memory_space<vmem>>, vector<1x256xf32>
    %77 = vector.broadcast %76 : vector<1x256xf32> to vector<8x256xf32>
    %78 = arith.mulf %75, %77 : vector<8x256xf32>
    %c96 = arith.constant 96 : index
    %c0_57 = arith.constant 0 : index
    %79 = vector.load %arg9[%c96, %c0_57] : memref<216x256xf32, #tpu.memory_space<vmem>>, vector<8x256xf32>
    tpu.vector_store %arg9[%c96, %c0_57], %78 {strides = array<i32>} : memref<216x256xf32, #tpu.memory_space<vmem>>, vector<8x256xf32>,
    %c0_58 = arith.constant 0 : index
    %c128_59 = arith.constant 128 : index
    %80 = vector.load %arg8[%c0_58, %c128_59] : memref<8x512xf32, #tpu.memory_space<vmem>>, vector<8x256xf32>
    %c13 = arith.constant 13 : index
    %c0_60 = arith.constant 0 : index
    %81 = vector.load %arg6[%c13, %c0_60] : memref<27x256xf32, #tpu.memory_space<vmem>>, vector<1x256xf32>
    %82 = vector.broadcast %81 : vector<1x256xf32> to vector<8x256xf32>
    %83 = arith.mulf %80, %82 : vector<8x256xf32>
    %c104 = arith.constant 104 : index
    %c0_61 = arith.constant 0 : index
    %84 = vector.load %arg9[%c104, %c0_61] : memref<216x256xf32, #tpu.memory_space<vmem>>, vector<8x256xf32>
    tpu.vector_store %arg9[%c104, %c0_61], %83 {strides = array<i32>} : memref<216x256xf32, #tpu.memory_space<vmem>>, vector<8x256xf32>,
    %c0_62 = arith.constant 0 : index
    %c129 = arith.constant 129 : index
    %85 = vector.load %arg8[%c0_62, %c129] : memref<8x512xf32, #tpu.memory_space<vmem>>, vector<8x256xf32>
    %c14 = arith.constant 14 : index
    %c0_63 = arith.constant 0 : index
    %86 = vector.load %arg6[%c14, %c0_63] : memref<27x256xf32, #tpu.memory_space<vmem>>, vector<1x256xf32>
    %87 = vector.broadcast %86 : vector<1x256xf32> to vector<8x256xf32>
    %88 = arith.mulf %85, %87 : vector<8x256xf32>
    %c112 = arith.constant 112 : index
    %c0_64 = arith.constant 0 : index
    %89 = vector.load %arg9[%c112, %c0_64] : memref<216x256xf32, #tpu.memory_space<vmem>>, vector<8x256xf32>
    tpu.vector_store %arg9[%c112, %c0_64], %88 {strides = array<i32>} : memref<216x256xf32, #tpu.memory_space<vmem>>, vector<8x256xf32>,
    %c0_65 = arith.constant 0 : index
    %c135 = arith.constant 135 : index
    %90 = vector.load %arg8[%c0_65, %c135] : memref<8x512xf32, #tpu.memory_space<vmem>>, vector<8x256xf32>
    %c15 = arith.constant 15 : index
    %c0_66 = arith.constant 0 : index
    %91 = vector.load %arg6[%c15, %c0_66] : memref<27x256xf32, #tpu.memory_space<vmem>>, vector<1x256xf32>
    %92 = vector.broadcast %91 : vector<1x256xf32> to vector<8x256xf32>
    %93 = arith.mulf %90, %92 : vector<8x256xf32>
    %c120_67 = arith.constant 120 : index
    %c0_68 = arith.constant 0 : index
    %94 = vector.load %arg9[%c120_67, %c0_68] : memref<216x256xf32, #tpu.memory_space<vmem>>, vector<8x256xf32>
    tpu.vector_store %arg9[%c120_67, %c0_68], %93 {strides = array<i32>} : memref<216x256xf32, #tpu.memory_space<vmem>>, vector<8x256xf32>,
    %c0_69 = arith.constant 0 : index
    %c136 = arith.constant 136 : index
    %95 = vector.load %arg8[%c0_69, %c136] : memref<8x512xf32, #tpu.memory_space<vmem>>, vector<8x256xf32>
    %c16_70 = arith.constant 16 : index
    %c0_71 = arith.constant 0 : index
    %96 = vector.load %arg6[%c16_70, %c0_71] : memref<27x256xf32, #tpu.memory_space<vmem>>, vector<1x256xf32>
    %97 = vector.broadcast %96 : vector<1x256xf32> to vector<8x256xf32>
    %98 = arith.mulf %95, %97 : vector<8x256xf32>
    %c128_72 = arith.constant 128 : index
    %c0_73 = arith.constant 0 : index
    %99 = vector.load %arg9[%c128_72, %c0_73] : memref<216x256xf32, #tpu.memory_space<vmem>>, vector<8x256xf32>
    tpu.vector_store %arg9[%c128_72, %c0_73], %98 {strides = array<i32>} : memref<216x256xf32, #tpu.memory_space<vmem>>, vector<8x256xf32>,
    %c0_74 = arith.constant 0 : index
    %c137 = arith.constant 137 : index
    %100 = vector.load %arg8[%c0_74, %c137] : memref<8x512xf32, #tpu.memory_space<vmem>>, vector<8x256xf32>
    %c17 = arith.constant 17 : index
    %c0_75 = arith.constant 0 : index
    %101 = vector.load %arg6[%c17, %c0_75] : memref<27x256xf32, #tpu.memory_space<vmem>>, vector<1x256xf32>
    %102 = vector.broadcast %101 : vector<1x256xf32> to vector<8x256xf32>
    %103 = arith.mulf %100, %102 : vector<8x256xf32>
    %c136_76 = arith.constant 136 : index
    %c0_77 = arith.constant 0 : index
    %104 = vector.load %arg9[%c136_76, %c0_77] : memref<216x256xf32, #tpu.memory_space<vmem>>, vector<8x256xf32>
    tpu.vector_store %arg9[%c136_76, %c0_77], %103 {strides = array<i32>} : memref<216x256xf32, #tpu.memory_space<vmem>>, vector<8x256xf32>,
    %c0_78 = arith.constant 0 : index
    %c183 = arith.constant 183 : index
    %105 = vector.load %arg8[%c0_78, %c183] : memref<8x512xf32, #tpu.memory_space<vmem>>, vector<8x256xf32>
    %c18 = arith.constant 18 : index
    %c0_79 = arith.constant 0 : index
    %106 = vector.load %arg6[%c18, %c0_79] : memref<27x256xf32, #tpu.memory_space<vmem>>, vector<1x256xf32>
    %107 = vector.broadcast %106 : vector<1x256xf32> to vector<8x256xf32>
    %108 = arith.mulf %105, %107 : vector<8x256xf32>
    %c144 = arith.constant 144 : index
    %c0_80 = arith.constant 0 : index
    %109 = vector.load %arg9[%c144, %c0_80] : memref<216x256xf32, #tpu.memory_space<vmem>>, vector<8x256xf32>
    tpu.vector_store %arg9[%c144, %c0_80], %108 {strides = array<i32>} : memref<216x256xf32, #tpu.memory_space<vmem>>, vector<8x256xf32>,
    %c0_81 = arith.constant 0 : index
    %c184 = arith.constant 184 : index
    %110 = vector.load %arg8[%c0_81, %c184] : memref<8x512xf32, #tpu.memory_space<vmem>>, vector<8x256xf32>
    %c19 = arith.constant 19 : index
    %c0_82 = arith.constant 0 : index
    %111 = vector.load %arg6[%c19, %c0_82] : memref<27x256xf32, #tpu.memory_space<vmem>>, vector<1x256xf32>
    %112 = vector.broadcast %111 : vector<1x256xf32> to vector<8x256xf32>
    %113 = arith.mulf %110, %112 : vector<8x256xf32>
    %c152 = arith.constant 152 : index
    %c0_83 = arith.constant 0 : index
    %114 = vector.load %arg9[%c152, %c0_83] : memref<216x256xf32, #tpu.memory_space<vmem>>, vector<8x256xf32>
    tpu.vector_store %arg9[%c152, %c0_83], %113 {strides = array<i32>} : memref<216x256xf32, #tpu.memory_space<vmem>>, vector<8x256xf32>,
    %c0_84 = arith.constant 0 : index
    %c185 = arith.constant 185 : index
    %115 = vector.load %arg8[%c0_84, %c185] : memref<8x512xf32, #tpu.memory_space<vmem>>, vector<8x256xf32>
    %c20 = arith.constant 20 : index
    %c0_85 = arith.constant 0 : index
    %116 = vector.load %arg6[%c20, %c0_85] : memref<27x256xf32, #tpu.memory_space<vmem>>, vector<1x256xf32>
    %117 = vector.broadcast %116 : vector<1x256xf32> to vector<8x256xf32>
    %118 = arith.mulf %115, %117 : vector<8x256xf32>
    %c160 = arith.constant 160 : index
    %c0_86 = arith.constant 0 : index
    %119 = vector.load %arg9[%c160, %c0_86] : memref<216x256xf32, #tpu.memory_space<vmem>>, vector<8x256xf32>
    tpu.vector_store %arg9[%c160, %c0_86], %118 {strides = array<i32>} : memref<216x256xf32, #tpu.memory_space<vmem>>, vector<8x256xf32>,
    %c0_87 = arith.constant 0 : index
    %c191 = arith.constant 191 : index
    %120 = vector.load %arg8[%c0_87, %c191] : memref<8x512xf32, #tpu.memory_space<vmem>>, vector<8x256xf32>
    %c21 = arith.constant 21 : index
    %c0_88 = arith.constant 0 : index
    %121 = vector.load %arg6[%c21, %c0_88] : memref<27x256xf32, #tpu.memory_space<vmem>>, vector<1x256xf32>
    %122 = vector.broadcast %121 : vector<1x256xf32> to vector<8x256xf32>
    %123 = arith.mulf %120, %122 : vector<8x256xf32>
    %c168 = arith.constant 168 : index
    %c0_89 = arith.constant 0 : index
    %124 = vector.load %arg9[%c168, %c0_89] : memref<216x256xf32, #tpu.memory_space<vmem>>, vector<8x256xf32>
    tpu.vector_store %arg9[%c168, %c0_89], %123 {strides = array<i32>} : memref<216x256xf32, #tpu.memory_space<vmem>>, vector<8x256xf32>,
    %c0_90 = arith.constant 0 : index
    %c192 = arith.constant 192 : index
    %125 = vector.load %arg8[%c0_90, %c192] : memref<8x512xf32, #tpu.memory_space<vmem>>, vector<8x256xf32>
    %c22 = arith.constant 22 : index
    %c0_91 = arith.constant 0 : index
    %126 = vector.load %arg6[%c22, %c0_91] : memref<27x256xf32, #tpu.memory_space<vmem>>, vector<1x256xf32>
    %127 = vector.broadcast %126 : vector<1x256xf32> to vector<8x256xf32>
    %128 = arith.mulf %125, %127 : vector<8x256xf32>
    %c176 = arith.constant 176 : index
    %c0_92 = arith.constant 0 : index
    %129 = vector.load %arg9[%c176, %c0_92] : memref<216x256xf32, #tpu.memory_space<vmem>>, vector<8x256xf32>
    tpu.vector_store %arg9[%c176, %c0_92], %128 {strides = array<i32>} : memref<216x256xf32, #tpu.memory_space<vmem>>, vector<8x256xf32>,
    %c0_93 = arith.constant 0 : index
    %c193 = arith.constant 193 : index
    %130 = vector.load %arg8[%c0_93, %c193] : memref<8x512xf32, #tpu.memory_space<vmem>>, vector<8x256xf32>
    %c23 = arith.constant 23 : index
    %c0_94 = arith.constant 0 : index
    %131 = vector.load %arg6[%c23, %c0_94] : memref<27x256xf32, #tpu.memory_space<vmem>>, vector<1x256xf32>
    %132 = vector.broadcast %131 : vector<1x256xf32> to vector<8x256xf32>
    %133 = arith.mulf %130, %132 : vector<8x256xf32>
    %c184_95 = arith.constant 184 : index
    %c0_96 = arith.constant 0 : index
    %134 = vector.load %arg9[%c184_95, %c0_96] : memref<216x256xf32, #tpu.memory_space<vmem>>, vector<8x256xf32>
    tpu.vector_store %arg9[%c184_95, %c0_96], %133 {strides = array<i32>} : memref<216x256xf32, #tpu.memory_space<vmem>>, vector<8x256xf32>,
    %c0_97 = arith.constant 0 : index
    %c199 = arith.constant 199 : index
    %135 = vector.load %arg8[%c0_97, %c199] : memref<8x512xf32, #tpu.memory_space<vmem>>, vector<8x256xf32>
    %c24_98 = arith.constant 24 : index
    %c0_99 = arith.constant 0 : index
    %136 = vector.load %arg6[%c24_98, %c0_99] : memref<27x256xf32, #tpu.memory_space<vmem>>, vector<1x256xf32>
    %137 = vector.broadcast %136 : vector<1x256xf32> to vector<8x256xf32>
    %138 = arith.mulf %135, %137 : vector<8x256xf32>
    %c192_100 = arith.constant 192 : index
    %c0_101 = arith.constant 0 : index
    %139 = vector.load %arg9[%c192_100, %c0_101] : memref<216x256xf32, #tpu.memory_space<vmem>>, vector<8x256xf32>
    tpu.vector_store %arg9[%c192_100, %c0_101], %138 {strides = array<i32>} : memref<216x256xf32, #tpu.memory_space<vmem>>, vector<8x256xf32>,
    %c0_102 = arith.constant 0 : index
    %c200 = arith.constant 200 : index
    %140 = vector.load %arg8[%c0_102, %c200] : memref<8x512xf32, #tpu.memory_space<vmem>>, vector<8x256xf32>
    %c25 = arith.constant 25 : index
    %c0_103 = arith.constant 0 : index
    %141 = vector.load %arg6[%c25, %c0_103] : memref<27x256xf32, #tpu.memory_space<vmem>>, vector<1x256xf32>
    %142 = vector.broadcast %141 : vector<1x256xf32> to vector<8x256xf32>
    %143 = arith.mulf %140, %142 : vector<8x256xf32>
    %c200_104 = arith.constant 200 : index
    %c0_105 = arith.constant 0 : index
    %144 = vector.load %arg9[%c200_104, %c0_105] : memref<216x256xf32, #tpu.memory_space<vmem>>, vector<8x256xf32>
    tpu.vector_store %arg9[%c200_104, %c0_105], %143 {strides = array<i32>} : memref<216x256xf32, #tpu.memory_space<vmem>>, vector<8x256xf32>,
    %c0_106 = arith.constant 0 : index
    %c201 = arith.constant 201 : index
    %145 = vector.load %arg8[%c0_106, %c201] : memref<8x512xf32, #tpu.memory_space<vmem>>, vector<8x256xf32>
    %c26 = arith.constant 26 : index
    %c0_107 = arith.constant 0 : index
    %146 = vector.load %arg6[%c26, %c0_107] : memref<27x256xf32, #tpu.memory_space<vmem>>, vector<1x256xf32>
    %147 = vector.broadcast %146 : vector<1x256xf32> to vector<8x256xf32>
    %148 = arith.mulf %145, %147 : vector<8x256xf32>
    %c208 = arith.constant 208 : index
    %c0_108 = arith.constant 0 : index
    %149 = vector.load %arg9[%c208, %c0_108] : memref<216x256xf32, #tpu.memory_space<vmem>>, vector<8x256xf32>
    tpu.vector_store %arg9[%c208, %c0_108], %148 {strides = array<i32>} : memref<216x256xf32, #tpu.memory_space<vmem>>, vector<8x256xf32>,
    %c0_109 = arith.constant 0 : index
    %c0_110 = arith.constant 0 : index
    %150 = vector.load %arg4[%c0_109, %c0_110] : memref<32x216xbf16, #tpu.memory_space<vmem>>, vector<32x216xbf16>
    %c0_111 = arith.constant 0 : index
    %c0_112 = arith.constant 0 : index
    %151 = vector.load %arg9[%c0_111, %c0_112] : memref<216x256xf32, #tpu.memory_space<vmem>>, vector<216x256xf32>
    %152 = arith.truncf %151 : vector<216x256xf32> to vector<216x256xbf16>
    %cst_113 = arith.constant dense<0.000000e+00> : vector<32x256xf32>
    %153 = tpu.matmul %150, %152, %cst_113 {dimension_numbers = #tpu.dot_dimension_numbers<[1], [0], [0], [1], [0, 0, 1, 1], [], []>} : vector<32x216xbf16>, vector<216x256xbf16>, vector<32x256xf32> -> vector<32x256xf32>
    %c0_114 = arith.constant 0 : index
    %c0_115 = arith.constant 0 : index
    %154 = vector.load %arg5[%c0_114, %c0_115] : memref<32x1xf32, #tpu.memory_space<vmem>>, vector<32x1xf32>
    %155 = vector.broadcast %154 : vector<32x1xf32> to vector<32x256xf32>
    %156 = arith.addf %153, %155 : vector<32x256xf32>
    %157 = arith.addf %156, %1 : vector<32x256xf32>
    %cst_116 = arith.constant 0.000000e+00 : f32
    %158 = vector.broadcast %cst_116 : f32 to vector<32x256xf32>
    %159 = arith.maximumf %157, %158 : vector<32x256xf32>
    %c0_117 = arith.constant 0 : index
    %c0_118 = arith.constant 0 : index
    %c0_119 = arith.constant 0 : index
    %160 = vector.load %arg7[%c0_117, %c0_118, %c0_119] : memref<1x32x256xf32, #tpu.memory_space<vmem>>, vector<1x32x256xf32>
    %161 = vector.shape_cast %160 : vector<1x32x256xf32> to vector<32x256xf32>
    %162 = vector.shape_cast %159 : vector<32x256xf32> to vector<1x32x256xf32>
    tpu.vector_store %arg7[%c0_117, %c0_118, %c0_119], %162 {strides = array<i32>} : memref<1x32x256xf32, #tpu.memory_space<vmem>>, vector<1x32x256xf32>,
    return
  }
  func.func @transform_0(%arg0: i32) -> (i32, i32, i32) {
    %c0_i32 = arith.constant 0 : i32
    %c0_i32_0 = arith.constant 0 : i32
    %c0_i32_1 = arith.constant 0 : i32
    return %arg0, %c0_i32, %c0_i32_0 : i32, i32, i32
  }
  func.func @transform_1(%arg0: i32) -> (i32, i32) {
    %c0_i32 = arith.constant 0 : i32
    %c0_i32_0 = arith.constant 0 : i32
    %c0_i32_1 = arith.constant 0 : i32
    return %c0_i32, %c0_i32_0 : i32, i32
  }
  func.func @transform_2(%arg0: i32) -> (i32, i32) {
    %c0_i32 = arith.constant 0 : i32
    %c0_i32_0 = arith.constant 0 : i32
    %c0_i32_1 = arith.constant 0 : i32
    return %c0_i32, %c0_i32_0 : i32, i32
  }
  func.func @transform_3(%arg0: i32) -> (i32, i32) {
    %c0_i32 = arith.constant 0 : i32
    %c0_i32_0 = arith.constant 0 : i32
    %c0_i32_1 = arith.constant 0 : i32
    return %c0_i32, %c0_i32_0 : i32, i32
  }
  func.func @transform_4(%arg0: i32) -> (i32, i32) {
    %c0_i32 = arith.constant 0 : i32
    %c0_i32_0 = arith.constant 0 : i32
    %c0_i32_1 = arith.constant 0 : i32
    return %c0_i32, %c0_i32_0 : i32, i32
  }
  func.func @transform_5(%arg0: i32) -> (i32, i32) {
    %c0_i32 = arith.constant 0 : i32
    %c0_i32_0 = arith.constant 0 : i32
    %c0_i32_1 = arith.constant 0 : i32
    return %c0_i32, %c0_i32_0 : i32, i32
  }
  func.func @transform_6(%arg0: i32) -> (i32, i32, i32) {
    %c0_i32 = arith.constant 0 : i32
    %c0_i32_0 = arith.constant 0 : i32
    %c0_i32_1 = arith.constant 0 : i32
    return %arg0, %c0_i32, %c0_i32_0 : i32, i32, i32
  }
}

</mosaic_0001>

<llo_original>
// kernel: fire_forward.1
$region0: #{fire_forward.1}
  #allocation0 [shape = 'u32[]', space=smem, size = 0x4, offset = 0x4, fixed_abs, tag = 'smem constant byte address 0x4 - core index']
  #allocation1 [shape = 'u32[144,128]{1,0:T(1,128)}', space=vmem, size = 0x12000, scoped, tag = 'internal scratch']
  #allocation2 [shape = 'f32[8,512]{1,0:T(8,128)}', space=vmem, size = 0x4000, scoped, tag = 'scratch operand']
  #allocation3 [shape = 'f32[216,256]{1,0:T(8,128)}', space=vmem, size = 0x36000, scoped, tag = 'scratch operand']
  %s0 = inlined_call_operand.vmem [shape: f32[2,32,256], index: 0, kind: input, shape index: {}]
  %s1 = inlined_call_operand.vmem [shape: bf16[8,32], index: 1, kind: input, shape index: {}]
  %s2 = inlined_call_operand.vmem [shape: f32[8,1], index: 2, kind: input, shape index: {}]
  %s3 = inlined_call_operand.vmem [shape: bf16[32,216], index: 3, kind: input, shape index: {}]
  %s4 = inlined_call_operand.vmem [shape: f32[32,1], index: 4, kind: input, shape index: {}]
  %s5 = inlined_call_operand.vmem [shape: f32[27,256], index: 5, kind: input, shape index: {}]
  %s6 = inlined_call_operand.vmem [shape: f32[2,32,256], index: 6, kind: output, shape index: {}]
  %s7 = sld [smem:[#allocation0]]
  $region57: #{fire_forward.1} parent=0
    _
  %s9 = ssub.s32 1, %s7
  %s10 = scalar_select 0, %s9, %s7
  loop: start=0, step=1, limit=4
  $region2: #{fire_forward.1} parent=0 // loop_pre_header
    _
  $region3: #{fire_forward.1} parent=0 // loop_header
    %s12 = sphi 0, %s16
    %p13 = scmp.ge.s32.totalorder %s12, 4
    %s22 = sphi 0, %s24
    %s25 = sphi 0, %s22
    %s26 = sphi 0, %s25
    %s42 = sphi 0, %s26
    %s46 = sphi 0, %s46
    %s48 = sphi 0, %s46
    %s49 = sphi 0, %s48
    %s63 = sphi 0, %s49
    %s67 = sphi 0, %s67
    %s69 = sphi 0, %s67
    %s70 = sphi 0, %s69
    %s84 = sphi 0, %s70
    %s88 = sphi 0, %s88
    %s90 = sphi 0, %s88
    %s91 = sphi 0, %s90
    %s105 = sphi 0, %s91
    %s109 = sphi 0, %s109
    %s111 = sphi 0, %s109
    %s112 = sphi 0, %s111
    %s126 = sphi 0, %s112
    %s130 = sphi 0, %s130
    %s132 = sphi 0, %s130
    %s133 = sphi 0, %s132
    %s147 = sphi 0, %s133
    %s153 = sphi 0, %s155
    %s156 = sphi 0, %s153
    %s157 = sphi 0, %s156
    %s173 = sphi 0, %s157
  $region4: #{fire_forward.1} parent=0 // loop_header_branch
    %15 = sbr.rel (%p13) target = $region8
  $region5: #{fire_forward.1} parent=0 // loop_body
    %s17 = ssub.s32 %s12, 1
    %s18 = ssub.s32 %s12, 2
    %s19 = sadd.s32 %s12, 1
    %s20 = ssub.s32 %s12, %s19
    %p21 = scmp.eq.s32.totalorder %s20, 0
    %s23 = sadd.s32 %s22, 1
    %s24 = scalar_select %p21, %s22, %s23
    %p27 = pneg %p21
    %p28 = scmp.eq.s32.totalorder %s12, 1
    %p29 = por %p27, %p28
    %p30 = scmp.ne.s32.totalorder %s22, %s25
    %p31 = scmp.eq.s32.totalorder %s12, 0
    %p32 = por %p30, %p31
    %p33 = scmp.ne.s32.totalorder %s22, %s25
    %p34 = scmp.eq.s32.totalorder %s17, 1
    %p35 = por %p33, %p34
    %p36 = scmp.ne.s32.totalorder %s25, %s26
    %p37 = scmp.eq.s32.totalorder %s17, 0
    %p38 = por %p36, %p37
    %p39 = scmp.ne.s32.totalorder %s25, %s26
    %p40 = scmp.eq.s32.totalorder %s18, 1
    %p41 = por %p39, %p40
    %p43 = scmp.ne.s32.totalorder %s26, %s42
    %p44 = scmp.eq.s32.totalorder %s18, 0
    %p45 = por %p43, %p44
    %s47 = sadd.s32 %s46, 1
    %p50 = scmp.eq.s32.totalorder %s12, 1
    %p51 = scmp.ne.s32.totalorder %s46, %s48
    %p52 = scmp.eq.s32.totalorder %s12, 0
    %p53 = por %p51, %p52
    %p54 = scmp.ne.s32.totalorder %s46, %s48
    %p55 = scmp.eq.s32.totalorder %s17, 1
    %p56 = por %p54, %p55
    %p57 = scmp.ne.s32.totalorder %s48, %s49
    %p58 = scmp.eq.s32.totalorder %s17, 0
    %p59 = por %p57, %p58
    %p60 = scmp.ne.s32.totalorder %s48, %s49
    %p61 = scmp.eq.s32.totalorder %s18, 1
    %p62 = por %p60, %p61
    %p64 = scmp.ne.s32.totalorder %s49, %s63
    %p65 = scmp.eq.s32.totalorder %s18, 0
    %p66 = por %p64, %p65
    %s68 = sadd.s32 %s67, 1
    %p71 = scmp.eq.s32.totalorder %s12, 1
    %p72 = scmp.ne.s32.totalorder %s67, %s69
    %p73 = scmp.eq.s32.totalorder %s12, 0
    %p74 = por %p72, %p73
    %p75 = scmp.ne.s32.totalorder %s67, %s69
    %p76 = scmp.eq.s32.totalorder %s17, 1
    %p77 = por %p75, %p76
    %p78 = scmp.ne.s32.totalorder %s69, %s70
    %p79 = scmp.eq.s32.totalorder %s17, 0
    %p80 = por %p78, %p79
    %p81 = scmp.ne.s32.totalorder %s69, %s70
    %p82 = scmp.eq.s32.totalorder %s18, 1
    %p83 = por %p81, %p82
    %p85 = scmp.ne.s32.totalorder %s70, %s84
    %p86 = scmp.eq.s32.totalorder %s18, 0
    %p87 = por %p85, %p86
    %s89 = sadd.s32 %s88, 1
    %p92 = scmp.eq.s32.totalorder %s12, 1
    %p93 = scmp.ne.s32.totalorder %s88, %s90
    %p94 = scmp.eq.s32.totalorder %s12, 0
    %p95 = por %p93, %p94
    %p96 = scmp.ne.s32.totalorder %s88, %s90
    %p97 = scmp.eq.s32.totalorder %s17, 1
    %p98 = por %p96, %p97
    %p99 = scmp.ne.s32.totalorder %s90, %s91
    %p100 = scmp.eq.s32.totalorder %s17, 0
    %p101 = por %p99, %p100
    %p102 = scmp.ne.s32.totalorder %s90, %s91
    %p103 = scmp.eq.s32.totalorder %s18, 1
    %p104 = por %p102, %p103
    %p106 = scmp.ne.s32.totalorder %s91, %s105
    %p107 = scmp.eq.s32.totalorder %s18, 0
    %p108 = por %p106, %p107
    %s110 = sadd.s32 %s109, 1
    %p113 = scmp.eq.s32.totalorder %s12, 1
    %p114 = scmp.ne.s32.totalorder %s109, %s111
    %p115 = scmp.eq.s32.totalorder %s12, 0
    %p116 = por %p114, %p115
    %p117 = scmp.ne.s32.totalorder %s109, %s111
    %p118 = scmp.eq.s32.totalorder %s17, 1
    %p119 = por %p117, %p118
    %p120 = scmp.ne.s32.totalorder %s111, %s112
    %p121 = scmp.eq.s32.totalorder %s17, 0
    %p122 = por %p120, %p121
    %p123 = scmp.ne.s32.totalorder %s111, %s112
    %p124 = scmp.eq.s32.totalorder %s18, 1
    %p125 = por %p123, %p124
    %p127 = scmp.ne.s32.totalorder %s112, %s126
    %p128 = scmp.eq.s32.totalorder %s18, 0
    %p129 = por %p127, %p128
    %s131 = sadd.s32 %s130, 1
    %p134 = scmp.eq.s32.totalorder %s12, 1
    %p135 = scmp.ne.s32.totalorder %s130, %s132
    %p136 = scmp.eq.s32.totalorder %s12, 0
    %p137 = por %p135, %p136
    %p138 = scmp.ne.s32.totalorder %s130, %s132
    %p139 = scmp.eq.s32.totalorder %s17, 1
    %p140 = por %p138, %p139
    %p141 = scmp.ne.s32.totalorder %s132, %s133
    %p142 = scmp.eq.s32.totalorder %s17, 0
    %p143 = por %p141, %p142
    %p144 = scmp.ne.s32.totalorder %s132, %s133
    %p145 = scmp.eq.s32.totalorder %s18, 1
    %p146 = por %p144, %p145
    %p148 = scmp.ne.s32.totalorder %s133, %s147
    %p149 = scmp.eq.s32.totalorder %s18, 0
    %p150 = por %p148, %p149
    %s151 = ssub.s32 %s12, %s19
    %p152 = scmp.eq.s32.totalorder %s151, 0
    %s154 = sadd.s32 %s153, 1
    %s155 = scalar_select %p152, %s153, %s154
    %p158 = pneg %p152
    %p159 = scmp.eq.s32.totalorder %s12, 1
    %p160 = por %p158, %p159
    %p161 = scmp.ne.s32.totalorder %s153, %s156
    %p162 = scmp.eq.s32.totalorder %s12, 0
    %p163 = por %p161, %p162
    %p164 = scmp.ne.s32.totalorder %s153, %s156
    %p165 = scmp.eq.s32.totalorder %s17, 1
    %p166 = por %p164, %p165
    %p167 = scmp.ne.s32.totalorder %s156, %s157
    %p168 = scmp.eq.s32.totalorder %s17, 0
    %p169 = por %p167, %p168
    %p170 = scmp.ne.s32.totalorder %s156, %s157
    %p171 = scmp.eq.s32.totalorder %s18, 1
    %p172 = por %p170, %p171
    %p174 = scmp.ne.s32.totalorder %s157, %s173
    %p175 = scmp.eq.s32.totalorder %s18, 0
    %p176 = por %p174, %p175
    %p177 = scmp.le.s32.totalorder 1, %s12
    %p178 = scmp.lt.s32.totalorder %s12, 3
    %p179 = pnand %p177, %p178
    %p180 = pneg %p179
    // Predicated region
    $region9: #{fire_forward.1} parent=5 // pred_check
      _
    $region10: #{fire_forward.1} parent=5 // pred_check_branch
      %182 = sbr.rel (%p179) target = $region12
    $region11: #{fire_forward.1} parent=5 // pred_region
      %s183 = ssub.s32 %s12, 1
      // Predicated region
      $region13: #{fire_forward.1} parent=11 // pred_check
        %p184 = pneg %p59
      $region14: #{fire_forward.1} parent=11 // pred_check_branch
        %186 = sbr.rel (%p184) target = $region16
      $region15: #{fire_forward.1} parent=11 // pred_region
        _
      $region16: #{fire_forward.1} parent=11 // pred_fallthru
        _
      // Predicated region
      $region17: #{fire_forward.1} parent=11 // pred_check
        %p187 = pneg %p80
      $region18: #{fire_forward.1} parent=11 // pred_check_branch
        %189 = sbr.rel (%p187) target = $region20
      $region19: #{fire_forward.1} parent=11 // pred_region
        _
      $region20: #{fire_forward.1} parent=11 // pred_fallthru
        _
      // Predicated region
      $region21: #{fire_forward.1} parent=11 // pred_check
        %p190 = pneg %p101
      $region22: #{fire_forward.1} parent=11 // pred_check_branch
        %192 = sbr.rel (%p190) target = $region24
      $region23: #{fire_forward.1} parent=11 // pred_region
        _
      $region24: #{fire_forward.1} parent=11 // pred_fallthru
        _
      // Predicated region
      $region25: #{fire_forward.1} parent=11 // pred_check
        %p193 = pneg %p122
      $region26: #{fire_forward.1} parent=11 // pred_check_branch
        %195 = sbr.rel (%p193) target = $region28
      $region27: #{fire_forward.1} parent=11 // pred_region
        _
      $region28: #{fire_forward.1} parent=11 // pred_fallthru
        _
      // Predicated region
      $region29: #{fire_forward.1} parent=11 // pred_check
        %p196 = pneg %p143
      $region30: #{fire_forward.1} parent=11 // pred_check_branch
        %198 = sbr.rel (%p196) target = $region32
      $region31: #{fire_forward.1} parent=11 // pred_region
        _
      $region32: #{fire_forward.1} parent=11 // pred_fallthru
        _
    $region12: #{fire_forward.1} parent=5 // pred_fallthru
      _
    %p199 = scmp.lt.s32.totalorder %s12, 2
    // Predicated region
    $region33: #{fire_forward.1} parent=5 // pred_check
      %p200 = pneg %p199
    $region34: #{fire_forward.1} parent=5 // pred_check_branch
      %202 = sbr.rel (%p200) target = $region36
    $region35: #{fire_forward.1} parent=5 // pred_region
      // Predicated region
      $region37: #{fire_forward.1} parent=35 // pred_check
        %p203 = pneg %p32
      $region38: #{fire_forward.1} parent=35 // pred_check_branch
        %205 = sbr.rel (%p203) target = $region40
      $region39: #{fire_forward.1} parent=35 // pred_region
        %p206 = scmp.lt.s32.totalorder %s12, 1
        %s207 = scalar_select %p206, %s12, 1
        %s208 = smul.addr %s207, 8
        %s209 = smul.addr %s208, 8
        %s210 = scalar_lea.vmem %s0, %s209
      $region40: #{fire_forward.1} parent=35 // pred_fallthru
        _
    $region36: #{fire_forward.1} parent=5 // pred_fallthru
      _
    %p211 = scmp.le.s32.totalorder 1, %s12
    %p212 = scmp.lt.s32.totalorder %s12, 3
    %p213 = pnand %p211, %p212
    %p214 = pneg %p213
    // Predicated region
    $region41: #{fire_forward.1} parent=5 // pred_check
      _
    $region42: #{fire_forward.1} parent=5 // pred_check_branch
      %216 = sbr.rel (%p213) target = $region44
    $region43: #{fire_forward.1} parent=5 // pred_region
      %s217 = ssub.s32 %s12, 1
      %p218 = scmp.lt.s32.totalorder %s17, 1
      %s219 = scalar_select %p218, %s17, 1
      %s220 = smul.addr %s219, 8
      %s221 = smul.addr %s220, 8
      %s222 = scalar_lea.vmem %s0, %s221
      %p223 = pneg %p38
      %p224 = pneg %p35
      %p225 = pneg %p59
      %p226 = pneg %p56
      %p227 = pneg %p80
      %p228 = pneg %p77
      %p229 = pneg %p101
      %p230 = pneg %p98
      %p231 = pneg %p122
      %p232 = pneg %p119
      %p233 = pneg %p143
      %p234 = pneg %p140
      %p235 = pneg %p169
      %p236 = pneg %p166
      %p237 = scmp.lt.s32.totalorder %s17, 1
      %s238 = scalar_select %p237, %s17, 1
      %s239 = smul.addr %s238, 8
      %s240 = smul.addr %s239, 8
      %s241 = scalar_lea.vmem %s6, %s240
      %p242 = scmp.lt.s32.totalorder %s17, 1
      %s243 = scalar_select %p242, %s17, 1
      %s244 = smul.addr %s243, 8
      %s245 = smul.addr %s244, 8
      %s246 = scalar_lea.vmem %s0, %s245
      %p247 = scmp.lt.s32.totalorder %s17, 1
      %s248 = scalar_select %p247, %s17, 1
      %s249 = smul.addr %s248, 8
      %s250 = smul.addr %s249, 8
      %s251 = scalar_lea.vmem %s6, %s250
      %v253 = vld [vmem:[%s246] sm:$0xff]
      %v254 = vld [vmem:[%s246 + $0x8] sm:$0xff]
      %v255 = vld [vmem:[%s246 + $0x10] sm:$0xff]
      %v256 = vld [vmem:[%s246 + $0x18] sm:$0xff]
      %v257 = vld [vmem:[%s246 + $0x20] sm:$0xff]
      %v258 = vld [vmem:[%s246 + $0x28] sm:$0xff]
      %v259 = vld [vmem:[%s246 + $0x30] sm:$0xff]
      %v260 = vld [vmem:[%s246 + $0x38] sm:$0xff]
      %v261 = vld [vmem:[%s1] sm:$0xf]
      %v262 = vpack.c.bf16 %v255, %v253
      %v263 = vpack.c.bf16 %v256, %v254
      %v264 = vpack.c.bf16 %v259, %v257
      %v265 = vpack.c.bf16 %v260, %v258
      %v266 = vld [vmem:[%s2] sm:$0xff]
      %268 = vset.pattern.permute.xlu0 0
      %269 = vperm.xlu0 %268, %v266
      %v270 = vpop.permute.xlu0 %269
      %vm272 = vcmask 261120
      %v274 = vsel %vm272, %v261, 0
      %276 = vmatprep.subr.bf16.mxu0 %v263
      %277 = vmatpush1.bf16.msra.mxu0 %v262
      %278 = vmatprep.subr.bf16.mxu0 %v265
      %279 = vmatpush1.bf16.msra.mxu0 %v264
      %280 = vmatprep.subr.bf16.mxu0 0
      %281 = vmatpush1.bf16.msra.mxu0 0
      %282 = vmatprep.subr.bf16.mxu0 0
      %283 = vmatpush1.bf16.msra.mxu0 0
      %284 = vmatprep.subr.bf16.mxu0 0
      %285 = vmatpush1.bf16.msra.mxu0 0
      %286 = vmatprep.subr.bf16.mxu0 0
      %287 = vmatpush1.bf16.msra.mxu0 0
      %288 = vmatprep.subr.bf16.mxu0 0
      %289 = vmatpush1.bf16.msra.mxu0 0
      %290 = vmatprep.subr.bf16.mxu0 0
      %291 = vmatpush1.bf16.msra.mxu0 0
      %292 = vmatprep.subr.bf16.mxu0 0
      %293 = vmatpush1.bf16.msra.mxu0 0
      %294 = vmatprep.subr.bf16.mxu0 0
      %295 = vmatpush1.bf16.msra.mxu0 0
      %296 = vmatprep.subr.bf16.mxu0 0
      %297 = vmatpush1.bf16.msra.mxu0 0
      %298 = vmatprep.subr.bf16.mxu0 0
      %299 = vmatpush1.bf16.msra.mxu0 0
      %300 = vmatprep.subr.bf16.mxu0 0
      %301 = vmatpush1.bf16.msra.mxu0 0
      %302 = vmatprep.subr.bf16.mxu0 0
      %303 = vmatpush1.bf16.msra.mxu0 0
      %304 = vmatprep.subr.bf16.mxu0 0
      %305 = vmatpush1.bf16.msra.mxu0 0
      %306 = vmatprep.subr.bf16.mxu0 0
      %307 = vmatpush1.bf16.msra.mxu0 0
      %308 = vmatprep.mubr.bf16.mxu0 0
      %309 = vmatmul.mubr.bf16.gmra.mrb[0].mxu0 %v274
      %v310 = vpop.f32.mrb[0].mxu0
      %v311 = vadd.f32 %v270, %v310
      %v312 = vpop.f32.mrb[0].mxu0
      %v313 = vadd.f32 %v270, %v312
      %v314 = vpop.f32.mrb[0].mxu0
      %v315 = vpop.f32.mrb[0].mxu0
      %316 = vdwg.mxu0
      %v317 = vmax.f32 %v311, 0.0
      %v318 = vmax.f32 %v313, 0.0
      %319 = vst [vmem:[#allocation2] sm:$0xff] 0.0
      %320 = vst [vmem:[#allocation2 + $0x18] sm:$0xff] 0.0
      %321 = vst [vmem:[#allocation2 + $0x8] sm:$0xff] %v317
      %322 = vst [vmem:[#allocation2 + $0x10] sm:$0xff] %v318
      %v323 = vld [vmem:[#allocation2] sm:$0xff]
      %v324 = vld [vmem:[#allocation2 + $0x8] sm:$0xff]
      %v325 = vld [vmem:[#allocation2 + $0x10] sm:$0xff]
      %v326 = vld [vmem:[%s5] ss:$8 sm:$0x3]
      %v328 = vlaneseq
      %v329 = vshrl.u32 %v328, 7
      %v330 = vsub.s32 0, %v329
      %v331 = vrot.slane %v326, %v330
      %v332 = vlaneseq
      %v333 = vshrl.u32 %v332, 7
      %v334 = vsub.s32 1, %v333
      %v335 = vrot.slane %v326, %v334
      %336 = vrot.lane.b32.xlu0 %v331, 55
      %v337 = vpop.permute.xlu0 %336
      %338 = vrot.lane.b32.xlu0 %v335, 55
      %v339 = vpop.permute.xlu0 %338
      %vm340 = vcmask 449536
      %v341 = vsel %vm340, %v337, %v339
      %v345 = vmul.f32 %v323, %v337
      %v346 = vmul.f32 %v324, %v341
      %v347 = vmul.f32 %v325, %v339
      %351 = vrot.lane.b32.xlu0 %v345, 73
      %v352 = vpop.permute.xlu0 %351
      %353 = vrot.lane.b32.xlu0 %v346, 73
      %v354 = vpop.permute.xlu0 %353
      %355 = vrot.lane.b32.xlu0 %v347, 73
      %v356 = vpop.permute.xlu0 %355
      %vm357 = vcmask 596992
      %v358 = vsel %vm357, %v352, %v354
      %v359 = vsel %vm357, %v354, %v356
      %362 = vst [vmem:[#allocation3] sm:$0xff] %v358
      %363 = vst [vmem:[#allocation3 + $0x8] sm:$0xff] %v359
      %v364 = vld [vmem:[#allocation2] sm:$0xff]
      %v365 = vld [vmem:[#allocation2 + $0x8] sm:$0xff]
      %v366 = vld [vmem:[#allocation2 + $0x10] sm:$0xff]
      %s367 = scalar_lea.vmem %s5, 1
      %v368 = vld [vmem:[%s367] ss:$8 sm:$0x3]
      %v370 = vlaneseq
      %v371 = vshrl.u32 %v370, 7
      %v372 = vsub.s32 0, %v371
      %v373 = vrot.slane %v368, %v372
      %v374 = vlaneseq
      %v375 = vshrl.u32 %v374, 7
      %v376 = vsub.s32 1, %v375
      %v377 = vrot.slane %v368, %v376
      %378 = vrot.lane.b32.xlu0 %v373, 56
      %v379 = vpop.permute.xlu0 %378
      %380 = vrot.lane.b32.xlu0 %v377, 56
      %v381 = vpop.permute.xlu0 %380
      %vm382 = vcmask 457728
      %v383 = vsel %vm382, %v379, %v381
      %v387 = vmul.f32 %v364, %v379
      %v388 = vmul.f32 %v365, %v383
      %v389 = vmul.f32 %v366, %v381
      %393 = vrot.lane.b32.xlu0 %v387, 72
      %v394 = vpop.permute.xlu0 %393
      %395 = vrot.lane.b32.xlu0 %v388, 72
      %v396 = vpop.permute.xlu0 %395
      %397 = vrot.lane.b32.xlu0 %v389, 72
      %v398 = vpop.permute.xlu0 %397
      %vm399 = vcmask 588800
      %v400 = vsel %vm399, %v394, %v396
      %v401 = vsel %vm399, %v396, %v398
      %404 = vst [vmem:[#allocation3 + $0x10] sm:$0xff] %v400
      %405 = vst [vmem:[#allocation3 + $0x18] sm:$0xff] %v401
      %v406 = vld [vmem:[#allocation2] sm:$0xff]
      %v407 = vld [vmem:[#allocation2 + $0x8] sm:$0xff]
      %v408 = vld [vmem:[#allocation2 + $0x10] sm:$0xff]
      %s409 = scalar_lea.vmem %s5, 2
      %v410 = vld [vmem:[%s409] ss:$8 sm:$0x3]
      %v412 = vlaneseq
      %v413 = vshrl.u32 %v412, 7
      %v414 = vsub.s32 0, %v413
      %v415 = vrot.slane %v410, %v414
      %v416 = vlaneseq
      %v417 = vshrl.u32 %v416, 7
      %v418 = vsub.s32 1, %v417
      %v419 = vrot.slane %v410, %v418
      %420 = vrot.lane.b32.xlu0 %v415, 57
      %v421 = vpop.permute.xlu0 %420
      %422 = vrot.lane.b32.xlu0 %v419, 57
      %v423 = vpop.permute.xlu0 %422
      %vm424 = vcmask 465920
      %v425 = vsel %vm424, %v421, %v423
      %v429 = vmul.f32 %v406, %v421
      %v430 = vmul.f32 %v407, %v425
      %v431 = vmul.f32 %v408, %v423
      %435 = vrot.lane.b32.xlu0 %v429, 71
      %v436 = vpop.permute.xlu0 %435
      %437 = vrot.lane.b32.xlu0 %v430, 71
      %v438 = vpop.permute.xlu0 %437
      %439 = vrot.lane.b32.xlu0 %v431, 71
      %v440 = vpop.permute.xlu0 %439
      %vm441 = vcmask 580608
      %v442 = vsel %vm441, %v436, %v438
      %v443 = vsel %vm441, %v438, %v440
      %446 = vst [vmem:[#allocation3 + $0x20] sm:$0xff] %v442
      %447 = vst [vmem:[#allocation3 + $0x28] sm:$0xff] %v443
      %v448 = vld [vmem:[#allocation2] sm:$0xff]
      %v449 = vld [vmem:[#allocation2 + $0x8] sm:$0xff]
      %v450 = vld [vmem:[#allocation2 + $0x10] sm:$0xff]
      %s451 = scalar_lea.vmem %s5, 3
      %v452 = vld [vmem:[%s451] ss:$8 sm:$0x3]
      %v454 = vlaneseq
      %v455 = vshrl.u32 %v454, 7
      %v456 = vsub.s32 0, %v455
      %v457 = vrot.slane %v452, %v456
      %v458 = vlaneseq
      %v459 = vshrl.u32 %v458, 7
      %v460 = vsub.s32 1, %v459
      %v461 = vrot.slane %v452, %v460
      %462 = vrot.lane.b32.xlu0 %v457, 63
      %v463 = vpop.permute.xlu0 %462
      %464 = vrot.lane.b32.xlu0 %v461, 63
      %v465 = vpop.permute.xlu0 %464
      %vm466 = vcmask 515072
      %v467 = vsel %vm466, %v463, %v465
      %v471 = vmul.f32 %v448, %v463
      %v472 = vmul.f32 %v449, %v467
      %v473 = vmul.f32 %v450, %v465
      %477 = vrot.lane.b32.xlu0 %v471, 65
      %v478 = vpop.permute.xlu0 %477
      %479 = vrot.lane.b32.xlu0 %v472, 65
      %v480 = vpop.permute.xlu0 %479
      %481 = vrot.lane.b32.xlu0 %v473, 65
      %v482 = vpop.permute.xlu0 %481
      %vm483 = vcmask 531456
      %v484 = vsel %vm483, %v478, %v480
      %v485 = vsel %vm483, %v480, %v482
      %488 = vst [vmem:[#allocation3 + $0x30] sm:$0xff] %v484
      %489 = vst [vmem:[#allocation3 + $0x38] sm:$0xff] %v485
      %v490 = vld [vmem:[#allocation2] sm:$0xff]
      %v491 = vld [vmem:[#allocation2 + $0x8] sm:$0xff]
      %v492 = vld [vmem:[#allocation2 + $0x10] sm:$0xff]
      %s493 = scalar_lea.vmem %s5, 4
      %v494 = vld [vmem:[%s493] ss:$8 sm:$0x3]
      %v496 = vlaneseq
      %v497 = vshrl.u32 %v496, 7
      %v498 = vsub.s32 0, %v497
      %v499 = vrot.slane %v494, %v498
      %v500 = vlaneseq
      %v501 = vshrl.u32 %v500, 7
      %v502 = vsub.s32 1, %v501
      %v503 = vrot.slane %v494, %v502
      %504 = vrot.lane.b32.xlu0 %v499, 64
      %v505 = vpop.permute.xlu0 %504
      %506 = vrot.lane.b32.xlu0 %v503, 64
      %v507 = vpop.permute.xlu0 %506
      %vm508 = vcmask 523264
      %v509 = vsel %vm508, %v505, %v507
      %v513 = vmul.f32 %v490, %v505
      %v514 = vmul.f32 %v491, %v509
      %v515 = vmul.f32 %v492, %v507
      %519 = vrot.lane.b32.xlu0 %v513, 64
      %v520 = vpop.permute.xlu0 %519
      %521 = vrot.lane.b32.xlu0 %v514, 64
      %v522 = vpop.permute.xlu0 %521
      %523 = vrot.lane.b32.xlu0 %v515, 64
      %v524 = vpop.permute.xlu0 %523
      %v525 = vsel %vm508, %v520, %v522
      %v526 = vsel %vm508, %v522, %v524
      %529 = vst [vmem:[#allocation3 + $0x40] sm:$0xff] %v525
      %530 = vst [vmem:[#allocation3 + $0x48] sm:$0xff] %v526
      %v531 = vld [vmem:[#allocation2] sm:$0xff]
      %v532 = vld [vmem:[#allocation2 + $0x8] sm:$0xff]
      %v533 = vld [vmem:[#allocation2 + $0x10] sm:$0xff]
      %s534 = scalar_lea.vmem %s5, 5
      %v535 = vld [vmem:[%s534] ss:$8 sm:$0x3]
      %v537 = vlaneseq
      %v538 = vshrl.u32 %v537, 7
      %v539 = vsub.s32 0, %v538
      %v540 = vrot.slane %v535, %v539
      %v541 = vlaneseq
      %v542 = vshrl.u32 %v541, 7
      %v543 = vsub.s32 1, %v542
      %v544 = vrot.slane %v535, %v543
      %545 = vrot.lane.b32.xlu0 %v540, 65
      %v546 = vpop.permute.xlu0 %545
      %547 = vrot.lane.b32.xlu0 %v544, 65
      %v548 = vpop.permute.xlu0 %547
      %v549 = vsel %vm483, %v546, %v548
      %v553 = vmul.f32 %v531, %v546
      %v554 = vmul.f32 %v532, %v549
      %v555 = vmul.f32 %v533, %v548
      %559 = vrot.lane.b32.xlu0 %v553, 63
      %v560 = vpop.permute.xlu0 %559
      %561 = vrot.lane.b32.xlu0 %v554, 63
      %v562 = vpop.permute.xlu0 %561
      %563 = vrot.lane.b32.xlu0 %v555, 63
      %v564 = vpop.permute.xlu0 %563
      %v565 = vsel %vm466, %v560, %v562
      %v566 = vsel %vm466, %v562, %v564
      %569 = vst [vmem:[#allocation3 + $0x50] sm:$0xff] %v565
      %570 = vst [vmem:[#allocation3 + $0x58] sm:$0xff] %v566
      %v571 = vld [vmem:[#allocation2] sm:$0xff]
      %v572 = vld [vmem:[#allocation2 + $0x8] sm:$0xff]
      %v573 = vld [vmem:[#allocation2 + $0x10] sm:$0xff]
      %s574 = scalar_lea.vmem %s5, 6
      %v575 = vld [vmem:[%s574] ss:$8 sm:$0x3]
      %v577 = vlaneseq
      %v578 = vshrl.u32 %v577, 7
      %v579 = vsub.s32 0, %v578
      %v580 = vrot.slane %v575, %v579
      %v581 = vlaneseq
      %v582 = vshrl.u32 %v581, 7
      %v583 = vsub.s32 1, %v582
      %v584 = vrot.slane %v575, %v583
      %585 = vrot.lane.b32.xlu0 %v580, 71
      %v586 = vpop.permute.xlu0 %585
      %587 = vrot.lane.b32.xlu0 %v584, 71
      %v588 = vpop.permute.xlu0 %587
      %v589 = vsel %vm441, %v586, %v588
      %v593 = vmul.f32 %v571, %v586
      %v594 = vmul.f32 %v572, %v589
      %v595 = vmul.f32 %v573, %v588
      %599 = vrot.lane.b32.xlu0 %v593, 57
      %v600 = vpop.permute.xlu0 %599
      %601 = vrot.lane.b32.xlu0 %v594, 57
      %v602 = vpop.permute.xlu0 %601
      %603 = vrot.lane.b32.xlu0 %v595, 57
      %v604 = vpop.permute.xlu0 %603
      %v605 = vsel %vm424, %v600, %v602
      %v606 = vsel %vm424, %v602, %v604
      %609 = vst [vmem:[#allocation3 + $0x60] sm:$0xff] %v605
      %610 = vst [vmem:[#allocation3 + $0x68] sm:$0xff] %v606
      %v611 = vld [vmem:[#allocation2] sm:$0xff]
      %v612 = vld [vmem:[#allocation2 + $0x8] sm:$0xff]
      %v613 = vld [vmem:[#allocation2 + $0x10] sm:$0xff]
      %s614 = scalar_lea.vmem %s5, 7
      %v615 = vld [vmem:[%s614] ss:$8 sm:$0x3]
      %v617 = vlaneseq
      %v618 = vshrl.u32 %v617, 7
      %v619 = vsub.s32 0, %v618
      %v620 = vrot.slane %v615, %v619
      %v621 = vlaneseq
      %v622 = vshrl.u32 %v621, 7
      %v623 = vsub.s32 1, %v622
      %v624 = vrot.slane %v615, %v623
      %625 = vrot.lane.b32.xlu0 %v620, 72
      %v626 = vpop.permute.xlu0 %625
      %627 = vrot.lane.b32.xlu0 %v624, 72
      %v628 = vpop.permute.xlu0 %627
      %v629 = vsel %vm399, %v626, %v628
      %v633 = vmul.f32 %v611, %v626
      %v634 = vmul.f32 %v612, %v629
      %v635 = vmul.f32 %v613, %v628
      %639 = vrot.lane.b32.xlu0 %v633, 56
      %v640 = vpop.permute.xlu0 %639
      %641 = vrot.lane.b32.xlu0 %v634, 56
      %v642 = vpop.permute.xlu0 %641
      %643 = vrot.lane.b32.xlu0 %v635, 56
      %v644 = vpop.permute.xlu0 %643
      %v645 = vsel %vm382, %v640, %v642
      %v646 = vsel %vm382, %v642, %v644
      %649 = vst [vmem:[#allocation3 + $0x70] sm:$0xff] %v645
      %650 = vst [vmem:[#allocation3 + $0x78] sm:$0xff] %v646
      %v651 = vld [vmem:[#allocation2] sm:$0xff]
      %v652 = vld [vmem:[#allocation2 + $0x8] sm:$0xff]
      %v653 = vld [vmem:[#allocation2 + $0x10] sm:$0xff]
      %s654 = scalar_lea.vmem %s5, 16
      %v655 = vld [vmem:[%s654] ss:$8 sm:$0x3]
      %v657 = vlaneseq
      %v658 = vshrl.u32 %v657, 7
      %v659 = vsub.s32 0, %v658
      %v660 = vrot.slane %v655, %v659
      %v661 = vlaneseq
      %v662 = vshrl.u32 %v661, 7
      %v663 = vsub.s32 1, %v662
      %v664 = vrot.slane %v655, %v663
      %665 = vrot.lane.b32.xlu0 %v660, 73
      %v666 = vpop.permute.xlu0 %665
      %667 = vrot.lane.b32.xlu0 %v664, 73
      %v668 = vpop.permute.xlu0 %667
      %v669 = vsel %vm357, %v666, %v668
      %v673 = vmul.f32 %v651, %v666
      %v674 = vmul.f32 %v652, %v669
      %v675 = vmul.f32 %v653, %v668
      %679 = vrot.lane.b32.xlu0 %v673, 55
      %v680 = vpop.permute.xlu0 %679
      %681 = vrot.lane.b32.xlu0 %v674, 55
      %v682 = vpop.permute.xlu0 %681
      %683 = vrot.lane.b32.xlu0 %v675, 55
      %v684 = vpop.permute.xlu0 %683
      %v685 = vsel %vm340, %v680, %v682
      %v686 = vsel %vm340, %v682, %v684
      %689 = vst [vmem:[#allocation3 + $0x80] sm:$0xff] %v685
      %690 = vst [vmem:[#allocation3 + $0x88] sm:$0xff] %v686
      %v691 = vld [vmem:[#allocation2] sm:$0xff]
      %v692 = vld [vmem:[#allocation2 + $0x8] sm:$0xff]
      %v693 = vld [vmem:[#allocation2 + $0x10] sm:$0xff]
      %s694 = scalar_lea.vmem %s5, 17
      %v695 = vld [vmem:[%s694] ss:$8 sm:$0x3]
      %v697 = vlaneseq
      %v698 = vshrl.u32 %v697, 7
      %v699 = vsub.s32 0, %v698
      %v700 = vrot.slane %v695, %v699
      %v701 = vlaneseq
      %v702 = vshrl.u32 %v701, 7
      %v703 = vsub.s32 1, %v702
      %v704 = vrot.slane %v695, %v703
      %705 = vrot.lane.b32.xlu0 %v700, 119
      %v706 = vpop.permute.xlu0 %705
      %707 = vrot.lane.b32.xlu0 %v704, 119
      %v708 = vpop.permute.xlu0 %707
      %vm709 = vcmask 973824
      %v710 = vsel %vm709, %v706, %v708
      %v714 = vmul.f32 %v691, %v706
      %v715 = vmul.f32 %v692, %v710
      %v716 = vmul.f32 %v693, %v708
      %720 = vrot.lane.b32.xlu0 %v714, 9
      %v721 = vpop.permute.xlu0 %720
      %722 = vrot.lane.b32.xlu0 %v715, 9
      %v723 = vpop.permute.xlu0 %722
      %724 = vrot.lane.b32.xlu0 %v716, 9
      %v725 = vpop.permute.xlu0 %724
      %vm726 = vcmask 72704
      %v727 = vsel %vm726, %v721, %v723
      %v728 = vsel %vm726, %v723, %v725
      %731 = vst [vmem:[#allocation3 + $0x90] sm:$0xff] %v727
      %732 = vst [vmem:[#allocation3 + $0x98] sm:$0xff] %v728
      %v733 = vld [vmem:[#allocation2] sm:$0xff]
      %v734 = vld [vmem:[#allocation2 + $0x8] sm:$0xff]
      %v735 = vld [vmem:[#allocation2 + $0x10] sm:$0xff]
      %s736 = scalar_lea.vmem %s5, 18
      %v737 = vld [vmem:[%s736] ss:$8 sm:$0x3]
      %v739 = vlaneseq
      %v740 = vshrl.u32 %v739, 7
      %v741 = vsub.s32 0, %v740
      %v742 = vrot.slane %v737, %v741
      %v743 = vlaneseq
      %v744 = vshrl.u32 %v743, 7
      %v745 = vsub.s32 1, %v744
      %v746 = vrot.slane %v737, %v745
      %747 = vrot.lane.b32.xlu0 %v742, 120
      %v748 = vpop.permute.xlu0 %747
      %749 = vrot.lane.b32.xlu0 %v746, 120
      %v750 = vpop.permute.xlu0 %749
      %vm751 = vcmask 982016
      %v752 = vsel %vm751, %v748, %v750
      %v756 = vmul.f32 %v733, %v748
      %v757 = vmul.f32 %v734, %v752
      %v758 = vmul.f32 %v735, %v750
      %762 = vrot.lane.b32.xlu0 %v756, 8
      %v763 = vpop.permute.xlu0 %762
      %764 = vrot.lane.b32.xlu0 %v757, 8
      %v765 = vpop.permute.xlu0 %764
      %766 = vrot.lane.b32.xlu0 %v758, 8
      %v767 = vpop.permute.xlu0 %766
      %vm768 = vcmask 64512
      %v769 = vsel %vm768, %v763, %v765
      %v770 = vsel %vm768, %v765, %v767
      %773 = vst [vmem:[#allocation3 + $0xa0] sm:$0xff] %v769
      %774 = vst [vmem:[#allocation3 + $0xa8] sm:$0xff] %v770
      %v775 = vld [vmem:[#allocation2] sm:$0xff]
      %v776 = vld [vmem:[#allocation2 + $0x8] sm:$0xff]
      %v777 = vld [vmem:[#allocation2 + $0x10] sm:$0xff]
      %s778 = scalar_lea.vmem %s5, 19
      %v779 = vld [vmem:[%s778] ss:$8 sm:$0x3]
      %v781 = vlaneseq
      %v782 = vshrl.u32 %v781, 7
      %v783 = vsub.s32 0, %v782
      %v784 = vrot.slane %v779, %v783
      %v785 = vlaneseq
      %v786 = vshrl.u32 %v785, 7
      %v787 = vsub.s32 1, %v786
      %v788 = vrot.slane %v779, %v787
      %789 = vrot.lane.b32.xlu0 %v784, 121
      %v790 = vpop.permute.xlu0 %789
      %791 = vrot.lane.b32.xlu0 %v788, 121
      %v792 = vpop.permute.xlu0 %791
      %vm793 = vcmask 990208
      %v794 = vsel %vm793, %v790, %v792
      %v798 = vmul.f32 %v775, %v790
      %v799 = vmul.f32 %v776, %v794
      %v800 = vmul.f32 %v777, %v792
      %804 = vrot.lane.b32.xlu0 %v798, 7
      %v805 = vpop.permute.xlu0 %804
      %806 = vrot.lane.b32.xlu0 %v799, 7
      %v807 = vpop.permute.xlu0 %806
      %808 = vrot.lane.b32.xlu0 %v800, 7
      %v809 = vpop.permute.xlu0 %808
      %vm810 = vcmask 56320
      %v811 = vsel %vm810, %v805, %v807
      %v812 = vsel %vm810, %v807, %v809
      %815 = vst [vmem:[#allocation3 + $0xb0] sm:$0xff] %v811
      %816 = vst [vmem:[#allocation3 + $0xb8] sm:$0xff] %v812
      %v817 = vld [vmem:[#allocation2] sm:$0xff]
      %v818 = vld [vmem:[#allocation2 + $0x8] sm:$0xff]
      %v819 = vld [vmem:[#allocation2 + $0x10] sm:$0xff]
      %s820 = scalar_lea.vmem %s5, 20
      %v821 = vld [vmem:[%s820] ss:$8 sm:$0x3]
      %v823 = vlaneseq
      %v824 = vshrl.u32 %v823, 7
      %v825 = vsub.s32 0, %v824
      %v826 = vrot.slane %v821, %v825
      %v827 = vlaneseq
      %v828 = vshrl.u32 %v827, 7
      %v829 = vsub.s32 1, %v828
      %v830 = vrot.slane %v821, %v829
      %831 = vrot.lane.b32.xlu0 %v826, 127
      %v832 = vpop.permute.xlu0 %831
      %833 = vrot.lane.b32.xlu0 %v830, 127
      %v834 = vpop.permute.xlu0 %833
      %vm835 = vcmask 1039360
      %v836 = vsel %vm835, %v832, %v834
      %v840 = vmul.f32 %v817, %v832
      %v841 = vmul.f32 %v818, %v836
      %v842 = vmul.f32 %v819, %v834
      %846 = vrot.lane.b32.xlu0 %v840, 1
      %v847 = vpop.permute.xlu0 %846
      %848 = vrot.lane.b32.xlu0 %v841, 1
      %v849 = vpop.permute.xlu0 %848
      %850 = vrot.lane.b32.xlu0 %v842, 1
      %v851 = vpop.permute.xlu0 %850
      %vm852 = vcmask 7168
      %v853 = vsel %vm852, %v847, %v849
      %v854 = vsel %vm852, %v849, %v851
      %857 = vst [vmem:[#allocation3 + $0xc0] sm:$0xff] %v853
      %858 = vst [vmem:[#allocation3 + $0xc8] sm:$0xff] %v854
      %v859 = vld [vmem:[#allocation2 + $0x8] sm:$0xff]
      %v860 = vld [vmem:[#allocation2 + $0x10] sm:$0xff]
      %s861 = scalar_lea.vmem %s5, 21
      %v862 = vld [vmem:[%s861] ss:$8 sm:$0x3]
      %v864 = vlaneseq
      %v865 = vshrl.u32 %v864, 7
      %v866 = vsub.s32 0, %v865
      %v867 = vrot.slane %v862, %v866
      %v868 = vlaneseq
      %v869 = vshrl.u32 %v868, 7
      %v870 = vsub.s32 1, %v869
      %v871 = vrot.slane %v862, %v870
      %v874 = vmul.f32 %v859, %v867
      %v875 = vmul.f32 %v860, %v871
      %876 = vst [vmem:[#allocation3 + $0xd0] sm:$0xff] %v874
      %877 = vst [vmem:[#allocation3 + $0xd8] sm:$0xff] %v875
      %v878 = vld [vmem:[#allocation2 + $0x8] sm:$0xff]
      %v879 = vld [vmem:[#allocation2 + $0x10] sm:$0xff]
      %v880 = vld [vmem:[#allocation2 + $0x18] sm:$0xff]
      %s881 = scalar_lea.vmem %s5, 22
      %v882 = vld [vmem:[%s881] ss:$8 sm:$0x3]
      %v884 = vlaneseq
      %v885 = vshrl.u32 %v884, 7
      %v886 = vsub.s32 0, %v885
      %v887 = vrot.slane %v882, %v886
      %v888 = vlaneseq
      %v889 = vshrl.u32 %v888, 7
      %v890 = vsub.s32 1, %v889
      %v891 = vrot.slane %v882, %v890
      %892 = vrot.lane.b32.xlu0 %v887, 1
      %v893 = vpop.permute.xlu0 %892
      %894 = vrot.lane.b32.xlu0 %v891, 1
      %v895 = vpop.permute.xlu0 %894
      %v896 = vsel %vm852, %v893, %v895
      %v900 = vmul.f32 %v878, %v893
      %v901 = vmul.f32 %v879, %v896
      %v902 = vmul.f32 %v880, %v895
      %906 = vrot.lane.b32.xlu0 %v900, 127
      %v907 = vpop.permute.xlu0 %906
      %908 = vrot.lane.b32.xlu0 %v901, 127
      %v909 = vpop.permute.xlu0 %908
      %910 = vrot.lane.b32.xlu0 %v902, 127
      %v911 = vpop.permute.xlu0 %910
      %v912 = vsel %vm835, %v907, %v909
      %v913 = vsel %vm835, %v909, %v911
      %916 = vst [vmem:[#allocation3 + $0xe0] sm:$0xff] %v912
      %917 = vst [vmem:[#allocation3 + $0xe8] sm:$0xff] %v913
      %v918 = vld [vmem:[#allocation2 + $0x8] sm:$0xff]
      %v919 = vld [vmem:[#allocation2 + $0x10] sm:$0xff]
      %v920 = vld [vmem:[#allocation2 + $0x18] sm:$0xff]
      %s921 = scalar_lea.vmem %s5, 23
      %v922 = vld [vmem:[%s921] ss:$8 sm:$0x3]
      %v924 = vlaneseq
      %v925 = vshrl.u32 %v924, 7
      %v926 = vsub.s32 0, %v925
      %v927 = vrot.slane %v922, %v926
      %v928 = vlaneseq
      %v929 = vshrl.u32 %v928, 7
      %v930 = vsub.s32 1, %v929
      %v931 = vrot.slane %v922, %v930
      %932 = vrot.lane.b32.xlu0 %v927, 7
      %v933 = vpop.permute.xlu0 %932
      %934 = vrot.lane.b32.xlu0 %v931, 7
      %v935 = vpop.permute.xlu0 %934
      %v936 = vsel %vm810, %v933, %v935
      %v940 = vmul.f32 %v918, %v933
      %v941 = vmul.f32 %v919, %v936
      %v942 = vmul.f32 %v920, %v935
      %946 = vrot.lane.b32.xlu0 %v940, 121
      %v947 = vpop.permute.xlu0 %946
      %948 = vrot.lane.b32.xlu0 %v941, 121
      %v949 = vpop.permute.xlu0 %948
      %950 = vrot.lane.b32.xlu0 %v942, 121
      %v951 = vpop.permute.xlu0 %950
      %v952 = vsel %vm793, %v947, %v949
      %v953 = vsel %vm793, %v949, %v951
      %956 = vst [vmem:[#allocation3 + $0xf0] sm:$0xff] %v952
      %957 = vst [vmem:[#allocation3 + $0xf8] sm:$0xff] %v953
      %v958 = vld [vmem:[#allocation2 + $0x8] sm:$0xff]
      %v959 = vld [vmem:[#allocation2 + $0x10] sm:$0xff]
      %v960 = vld [vmem:[#allocation2 + $0x18] sm:$0xff]
      %s961 = scalar_lea.vmem %s5, 32
      %v962 = vld [vmem:[%s961] ss:$8 sm:$0x3]
      %v964 = vlaneseq
      %v965 = vshrl.u32 %v964, 7
      %v966 = vsub.s32 0, %v965
      %v967 = vrot.slane %v962, %v966
      %v968 = vlaneseq
      %v969 = vshrl.u32 %v968, 7
      %v970 = vsub.s32 1, %v969
      %v971 = vrot.slane %v962, %v970
      %972 = vrot.lane.b32.xlu0 %v967, 8
      %v973 = vpop.permute.xlu0 %972
      %974 = vrot.lane.b32.xlu0 %v971, 8
      %v975 = vpop.permute.xlu0 %974
      %v976 = vsel %vm768, %v973, %v975
      %v980 = vmul.f32 %v958, %v973
      %v981 = vmul.f32 %v959, %v976
      %v982 = vmul.f32 %v960, %v975
      %986 = vrot.lane.b32.xlu0 %v980, 120
      %v987 = vpop.permute.xlu0 %986
      %988 = vrot.lane.b32.xlu0 %v981, 120
      %v989 = vpop.permute.xlu0 %988
      %990 = vrot.lane.b32.xlu0 %v982, 120
      %v991 = vpop.permute.xlu0 %990
      %v992 = vsel %vm751, %v987, %v989
      %v993 = vsel %vm751, %v989, %v991
      %996 = vst [vmem:[#allocation3 + $0x100] sm:$0xff] %v992
      %997 = vst [vmem:[#allocation3 + $0x108] sm:$0xff] %v993
      %v998 = vld [vmem:[#allocation2 + $0x8] sm:$0xff]
      %v999 = vld [vmem:[#allocation2 + $0x10] sm:$0xff]
      %v1000 = vld [vmem:[#allocation2 + $0x18] sm:$0xff]
      %s1001 = scalar_lea.vmem %s5, 33
      %v1002 = vld [vmem:[%s1001] ss:$8 sm:$0x3]
      %v1004 = vlaneseq
      %v1005 = vshrl.u32 %v1004, 7
      %v1006 = vsub.s32 0, %v1005
      %v1007 = vrot.slane %v1002, %v1006
      %v1008 = vlaneseq
      %v1009 = vshrl.u32 %v1008, 7
      %v1010 = vsub.s32 1, %v1009
      %v1011 = vrot.slane %v1002, %v1010
      %1012 = vrot.lane.b32.xlu0 %v1007, 9
      %v1013 = vpop.permute.xlu0 %1012
      %1014 = vrot.lane.b32.xlu0 %v1011, 9
      %v1015 = vpop.permute.xlu0 %1014
      %v1016 = vsel %vm726, %v1013, %v1015
      %v1020 = vmul.f32 %v998, %v1013
      %v1021 = vmul.f32 %v999, %v1016
      %v1022 = vmul.f32 %v1000, %v1015
      %1026 = vrot.lane.b32.xlu0 %v1020, 119
      %v1027 = vpop.permute.xlu0 %1026
      %1028 = vrot.lane.b32.xlu0 %v1021, 119
      %v1029 = vpop.permute.xlu0 %1028
      %1030 = vrot.lane.b32.xlu0 %v1022, 119
      %v1031 = vpop.permute.xlu0 %1030
      %v1032 = vsel %vm709, %v1027, %v1029
      %v1033 = vsel %vm709, %v1029, %v1031
      %1036 = vst [vmem:[#allocation3 + $0x110] sm:$0xff] %v1032
      %1037 = vst [vmem:[#allocation3 + $0x118] sm:$0xff] %v1033
      %v1038 = vld [vmem:[#allocation2 + $0x8] sm:$0xff]
      %v1039 = vld [vmem:[#allocation2 + $0x10] sm:$0xff]
      %v1040 = vld [vmem:[#allocation2 + $0x18] sm:$0xff]
      %s1041 = scalar_lea.vmem %s5, 34
      %v1042 = vld [vmem:[%s1041] ss:$8 sm:$0x3]
      %v1044 = vlaneseq
      %v1045 = vshrl.u32 %v1044, 7
      %v1046 = vsub.s32 0, %v1045
      %v1047 = vrot.slane %v1042, %v1046
      %v1048 = vlaneseq
      %v1049 = vshrl.u32 %v1048, 7
      %v1050 = vsub.s32 1, %v1049
      %v1051 = vrot.slane %v1042, %v1050
      %1052 = vrot.lane.b32.xlu0 %v1047, 55
      %v1053 = vpop.permute.xlu0 %1052
      %1054 = vrot.lane.b32.xlu0 %v1051, 55
      %v1055 = vpop.permute.xlu0 %1054
      %v1056 = vsel %vm340, %v1053, %v1055
      %v1060 = vmul.f32 %v1038, %v1053
      %v1061 = vmul.f32 %v1039, %v1056
      %v1062 = vmul.f32 %v1040, %v1055
      %1066 = vrot.lane.b32.xlu0 %v1060, 73
      %v1067 = vpop.permute.xlu0 %1066
      %1068 = vrot.lane.b32.xlu0 %v1061, 73
      %v1069 = vpop.permute.xlu0 %1068
      %1070 = vrot.lane.b32.xlu0 %v1062, 73
      %v1071 = vpop.permute.xlu0 %1070
      %v1072 = vsel %vm357, %v1067, %v1069
      %v1073 = vsel %vm357, %v1069, %v1071
      %1076 = vst [vmem:[#allocation3 + $0x120] sm:$0xff] %v1072
      %1077 = vst [vmem:[#allocation3 + $0x128] sm:$0xff] %v1073
      %v1078 = vld [vmem:[#allocation2 + $0x8] sm:$0xff]
      %v1079 = vld [vmem:[#allocation2 + $0x10] sm:$0xff]
      %v1080 = vld [vmem:[#allocation2 + $0x18] sm:$0xff]
      %s1081 = scalar_lea.vmem %s5, 35
      %v1082 = vld [vmem:[%s1081] ss:$8 sm:$0x3]
      %v1084 = vlaneseq
      %v1085 = vshrl.u32 %v1084, 7
      %v1086 = vsub.s32 0, %v1085
      %v1087 = vrot.slane %v1082, %v1086
      %v1088 = vlaneseq
      %v1089 = vshrl.u32 %v1088, 7
      %v1090 = vsub.s32 1, %v1089
      %v1091 = vrot.slane %v1082, %v1090
      %1092 = vrot.lane.b32.xlu0 %v1087, 56
      %v1093 = vpop.permute.xlu0 %1092
      %1094 = vrot.lane.b32.xlu0 %v1091, 56
      %v1095 = vpop.permute.xlu0 %1094
      %v1096 = vsel %vm382, %v1093, %v1095
      %v1100 = vmul.f32 %v1078, %v1093
      %v1101 = vmul.f32 %v1079, %v1096
      %v1102 = vmul.f32 %v1080, %v1095
      %1106 = vrot.lane.b32.xlu0 %v1100, 72
      %v1107 = vpop.permute.xlu0 %1106
      %1108 = vrot.lane.b32.xlu0 %v1101, 72
      %v1109 = vpop.permute.xlu0 %1108
      %1110 = vrot.lane.b32.xlu0 %v1102, 72
      %v1111 = vpop.permute.xlu0 %1110
      %v1112 = vsel %vm399, %v1107, %v1109
      %v1113 = vsel %vm399, %v1109, %v1111
      %1116 = vst [vmem:[#allocation3 + $0x130] sm:$0xff] %v1112
      %1117 = vst [vmem:[#allocation3 + $0x138] sm:$0xff] %v1113
      %v1118 = vld [vmem:[#allocation2 + $0x8] sm:$0xff]
      %v1119 = vld [vmem:[#allocation2 + $0x10] sm:$0xff]
      %v1120 = vld [vmem:[#allocation2 + $0x18] sm:$0xff]
      %s1121 = scalar_lea.vmem %s5, 36
      %v1122 = vld [vmem:[%s1121] ss:$8 sm:$0x3]
      %v1124 = vlaneseq
      %v1125 = vshrl.u32 %v1124, 7
      %v1126 = vsub.s32 0, %v1125
      %v1127 = vrot.slane %v1122, %v1126
      %v1128 = vlaneseq
      %v1129 = vshrl.u32 %v1128, 7
      %v1130 = vsub.s32 1, %v1129
      %v1131 = vrot.slane %v1122, %v1130
      %1132 = vrot.lane.b32.xlu0 %v1127, 57
      %v1133 = vpop.permute.xlu0 %1132
      %1134 = vrot.lane.b32.xlu0 %v1131, 57
      %v1135 = vpop.permute.xlu0 %1134
      %v1136 = vsel %vm424, %v1133, %v1135
      %v1140 = vmul.f32 %v1118, %v1133
      %v1141 = vmul.f32 %v1119, %v1136
      %v1142 = vmul.f32 %v1120, %v1135
      %1146 = vrot.lane.b32.xlu0 %v1140, 71
      %v1147 = vpop.permute.xlu0 %1146
      %1148 = vrot.lane.b32.xlu0 %v1141, 71
      %v1149 = vpop.permute.xlu0 %1148
      %1150 = vrot.lane.b32.xlu0 %v1142, 71
      %v1151 = vpop.permute.xlu0 %1150
      %v1152 = vsel %vm441, %v1147, %v1149
      %v1153 = vsel %vm441, %v1149, %v1151
      %1156 = vst [vmem:[#allocation3 + $0x140] sm:$0xff] %v1152
      %1157 = vst [vmem:[#allocation3 + $0x148] sm:$0xff] %v1153
      %v1158 = vld [vmem:[#allocation2 + $0x8] sm:$0xff]
      %v1159 = vld [vmem:[#allocation2 + $0x10] sm:$0xff]
      %v1160 = vld [vmem:[#allocation2 + $0x18] sm:$0xff]
      %s1161 = scalar_lea.vmem %s5, 37
      %v1162 = vld [vmem:[%s1161] ss:$8 sm:$0x3]
      %v1164 = vlaneseq
      %v1165 = vshrl.u32 %v1164, 7
      %v1166 = vsub.s32 0, %v1165
      %v1167 = vrot.slane %v1162, %v1166
      %v1168 = vlaneseq
      %v1169 = vshrl.u32 %v1168, 7
      %v1170 = vsub.s32 1, %v1169
      %v1171 = vrot.slane %v1162, %v1170
      %1172 = vrot.lane.b32.xlu0 %v1167, 63
      %v1173 = vpop.permute.xlu0 %1172
      %1174 = vrot.lane.b32.xlu0 %v1171, 63
      %v1175 = vpop.permute.xlu0 %1174
      %v1176 = vsel %vm466, %v1173, %v1175
      %v1180 = vmul.f32 %v1158, %v1173
      %v1181 = vmul.f32 %v1159, %v1176
      %v1182 = vmul.f32 %v1160, %v1175
      %1186 = vrot.lane.b32.xlu0 %v1180, 65
      %v1187 = vpop.permute.xlu0 %1186
      %1188 = vrot.lane.b32.xlu0 %v1181, 65
      %v1189 = vpop.permute.xlu0 %1188
      %1190 = vrot.lane.b32.xlu0 %v1182, 65
      %v1191 = vpop.permute.xlu0 %1190
      %v1192 = vsel %vm483, %v1187, %v1189
      %v1193 = vsel %vm483, %v1189, %v1191
      %1196 = vst [vmem:[#allocation3 + $0x150] sm:$0xff] %v1192
      %1197 = vst [vmem:[#allocation3 + $0x158] sm:$0xff] %v1193
      %v1198 = vld [vmem:[#allocation2 + $0x8] sm:$0xff]
      %v1199 = vld [vmem:[#allocation2 + $0x10] sm:$0xff]
      %v1200 = vld [vmem:[#allocation2 + $0x18] sm:$0xff]
      %s1201 = scalar_lea.vmem %s5, 38
      %v1202 = vld [vmem:[%s1201] ss:$8 sm:$0x3]
      %v1204 = vlaneseq
      %v1205 = vshrl.u32 %v1204, 7
      %v1206 = vsub.s32 0, %v1205
      %v1207 = vrot.slane %v1202, %v1206
      %v1208 = vlaneseq
      %v1209 = vshrl.u32 %v1208, 7
      %v1210 = vsub.s32 1, %v1209
      %v1211 = vrot.slane %v1202, %v1210
      %1212 = vrot.lane.b32.xlu0 %v1207, 64
      %v1213 = vpop.permute.xlu0 %1212
      %1214 = vrot.lane.b32.xlu0 %v1211, 64
      %v1215 = vpop.permute.xlu0 %1214
      %v1216 = vsel %vm508, %v1213, %v1215
      %v1220 = vmul.f32 %v1198, %v1213
      %v1221 = vmul.f32 %v1199, %v1216
      %v1222 = vmul.f32 %v1200, %v1215
      %1226 = vrot.lane.b32.xlu0 %v1220, 64
      %v1227 = vpop.permute.xlu0 %1226
      %1228 = vrot.lane.b32.xlu0 %v1221, 64
      %v1229 = vpop.permute.xlu0 %1228
      %1230 = vrot.lane.b32.xlu0 %v1222, 64
      %v1231 = vpop.permute.xlu0 %1230
      %v1232 = vsel %vm508, %v1227, %v1229
      %v1233 = vsel %vm508, %v1229, %v1231
      %1236 = vst [vmem:[#allocation3 + $0x160] sm:$0xff] %v1232
      %1237 = vst [vmem:[#allocation3 + $0x168] sm:$0xff] %v1233
      %v1238 = vld [vmem:[#allocation2 + $0x8] sm:$0xff]
      %v1239 = vld [vmem:[#allocation2 + $0x10] sm:$0xff]
      %v1240 = vld [vmem:[#allocation2 + $0x18] sm:$0xff]
      %s1241 = scalar_lea.vmem %s5, 39
      %v1242 = vld [vmem:[%s1241] ss:$8 sm:$0x3]
      %v1244 = vlaneseq
      %v1245 = vshrl.u32 %v1244, 7
      %v1246 = vsub.s32 0, %v1245
      %v1247 = vrot.slane %v1242, %v1246
      %v1248 = vlaneseq
      %v1249 = vshrl.u32 %v1248, 7
      %v1250 = vsub.s32 1, %v1249
      %v1251 = vrot.slane %v1242, %v1250
      %1252 = vrot.lane.b32.xlu0 %v1247, 65
      %v1253 = vpop.permute.xlu0 %1252
      %1254 = vrot.lane.b32.xlu0 %v1251, 65
      %v1255 = vpop.permute.xlu0 %1254
      %v1256 = vsel %vm483, %v1253, %v1255
      %v1260 = vmul.f32 %v1238, %v1253
      %v1261 = vmul.f32 %v1239, %v1256
      %v1262 = vmul.f32 %v1240, %v1255
      %1266 = vrot.lane.b32.xlu0 %v1260, 63
      %v1267 = vpop.permute.xlu0 %1266
      %1268 = vrot.lane.b32.xlu0 %v1261, 63
      %v1269 = vpop.permute.xlu0 %1268
      %1270 = vrot.lane.b32.xlu0 %v1262, 63
      %v1271 = vpop.permute.xlu0 %1270
      %v1272 = vsel %vm466, %v1267, %v1269
      %v1273 = vsel %vm466, %v1269, %v1271
      %1276 = vst [vmem:[#allocation3 + $0x170] sm:$0xff] %v1272
      %1277 = vst [vmem:[#allocation3 + $0x178] sm:$0xff] %v1273
      %v1278 = vld [vmem:[#allocation2 + $0x8] sm:$0xff]
      %v1279 = vld [vmem:[#allocation2 + $0x10] sm:$0xff]
      %v1280 = vld [vmem:[#allocation2 + $0x18] sm:$0xff]
      %s1281 = scalar_lea.vmem %s5, 48
      %v1282 = vld [vmem:[%s1281] ss:$8 sm:$0x3]
      %v1284 = vlaneseq
      %v1285 = vshrl.u32 %v1284, 7
      %v1286 = vsub.s32 0, %v1285
      %v1287 = vrot.slane %v1282, %v1286
      %v1288 = vlaneseq
      %v1289 = vshrl.u32 %v1288, 7
      %v1290 = vsub.s32 1, %v1289
      %v1291 = vrot.slane %v1282, %v1290
      %1292 = vrot.lane.b32.xlu0 %v1287, 71
      %v1293 = vpop.permute.xlu0 %1292
      %1294 = vrot.lane.b32.xlu0 %v1291, 71
      %v1295 = vpop.permute.xlu0 %1294
      %v1296 = vsel %vm441, %v1293, %v1295
      %v1300 = vmul.f32 %v1278, %v1293
      %v1301 = vmul.f32 %v1279, %v1296
      %v1302 = vmul.f32 %v1280, %v1295
      %1306 = vrot.lane.b32.xlu0 %v1300, 57
      %v1307 = vpop.permute.xlu0 %1306
      %1308 = vrot.lane.b32.xlu0 %v1301, 57
      %v1309 = vpop.permute.xlu0 %1308
      %1310 = vrot.lane.b32.xlu0 %v1302, 57
      %v1311 = vpop.permute.xlu0 %1310
      %v1312 = vsel %vm424, %v1307, %v1309
      %v1313 = vsel %vm424, %v1309, %v1311
      %1316 = vst [vmem:[#allocation3 + $0x180] sm:$0xff] %v1312
      %1317 = vst [vmem:[#allocation3 + $0x188] sm:$0xff] %v1313
      %v1318 = vld [vmem:[#allocation2 + $0x8] sm:$0xff]
      %v1319 = vld [vmem:[#allocation2 + $0x10] sm:$0xff]
      %v1320 = vld [vmem:[#allocation2 + $0x18] sm:$0xff]
      %s1321 = scalar_lea.vmem %s5, 49
      %v1322 = vld [vmem:[%s1321] ss:$8 sm:$0x3]
      %v1324 = vlaneseq
      %v1325 = vshrl.u32 %v1324, 7
      %v1326 = vsub.s32 0, %v1325
      %v1327 = vrot.slane %v1322, %v1326
      %v1328 = vlaneseq
      %v1329 = vshrl.u32 %v1328, 7
      %v1330 = vsub.s32 1, %v1329
      %v1331 = vrot.slane %v1322, %v1330
      %1332 = vrot.lane.b32.xlu0 %v1327, 72
      %v1333 = vpop.permute.xlu0 %1332
      %1334 = vrot.lane.b32.xlu0 %v1331, 72
      %v1335 = vpop.permute.xlu0 %1334
      %v1336 = vsel %vm399, %v1333, %v1335
      %v1340 = vmul.f32 %v1318, %v1333
      %v1341 = vmul.f32 %v1319, %v1336
      %v1342 = vmul.f32 %v1320, %v1335
      %1346 = vrot.lane.b32.xlu0 %v1340, 56
      %v1347 = vpop.permute.xlu0 %1346
      %1348 = vrot.lane.b32.xlu0 %v1341, 56
      %v1349 = vpop.permute.xlu0 %1348
      %1350 = vrot.lane.b32.xlu0 %v1342, 56
      %v1351 = vpop.permute.xlu0 %1350
      %v1352 = vsel %vm382, %v1347, %v1349
      %v1353 = vsel %vm382, %v1349, %v1351
      %1356 = vst [vmem:[#allocation3 + $0x190] sm:$0xff] %v1352
      %1357 = vst [vmem:[#allocation3 + $0x198] sm:$0xff] %v1353
      %v1358 = vld [vmem:[#allocation2 + $0x8] sm:$0xff]
      %v1359 = vld [vmem:[#allocation2 + $0x10] sm:$0xff]
      %v1360 = vld [vmem:[#allocation2 + $0x18] sm:$0xff]
      %s1361 = scalar_lea.vmem %s5, 50
      %v1362 = vld [vmem:[%s1361] ss:$8 sm:$0x3]
      %v1364 = vlaneseq
      %v1365 = vshrl.u32 %v1364, 7
      %v1366 = vsub.s32 0, %v1365
      %v1367 = vrot.slane %v1362, %v1366
      %v1368 = vlaneseq
      %v1369 = vshrl.u32 %v1368, 7
      %v1370 = vsub.s32 1, %v1369
      %v1371 = vrot.slane %v1362, %v1370
      %1372 = vrot.lane.b32.xlu0 %v1367, 73
      %v1373 = vpop.permute.xlu0 %1372
      %1374 = vrot.lane.b32.xlu0 %v1371, 73
      %v1375 = vpop.permute.xlu0 %1374
      %v1376 = vsel %vm357, %v1373, %v1375
      %v1380 = vmul.f32 %v1358, %v1373
      %v1381 = vmul.f32 %v1359, %v1376
      %v1382 = vmul.f32 %v1360, %v1375
      %1386 = vrot.lane.b32.xlu0 %v1380, 55
      %v1387 = vpop.permute.xlu0 %1386
      %1388 = vrot.lane.b32.xlu0 %v1381, 55
      %v1389 = vpop.permute.xlu0 %1388
      %1390 = vrot.lane.b32.xlu0 %v1382, 55
      %v1391 = vpop.permute.xlu0 %1390
      %v1392 = vsel %vm340, %v1387, %v1389
      %v1393 = vsel %vm340, %v1389, %v1391
      %1396 = vst [vmem:[#allocation3 + $0x1a0] sm:$0xff] %v1392
      %1397 = vst [vmem:[#allocation3 + $0x1a8] sm:$0xff] %v1393
      %v1398 = vld [vmem:[%s3] sm:$0xff]
      %v1399 = vld [vmem:[%s3 + $0x8] sm:$0xff]
      %v1400 = vld [vmem:[%s3 + $0x10] sm:$0xff]
      %v1401 = vld [vmem:[%s3 + $0x18] sm:$0xff]
      %v1402 = vld [vmem:[#allocation3] sm:$0xff]
      %v1403 = vld [vmem:[#allocation3 + $0x8] sm:$0xff]
      %v1404 = vld [vmem:[#allocation3 + $0x10] sm:$0xff]
      %v1405 = vld [vmem:[#allocation3 + $0x18] sm:$0xff]
      %v1406 = vld [vmem:[#allocation3 + $0x20] sm:$0xff]
      %v1407 = vld [vmem:[#allocation3 + $0x28] sm:$0xff]
      %v1408 = vld [vmem:[#allocation3 + $0x30] sm:$0xff]
      %v1409 = vld [vmem:[#allocation3 + $0x38] sm:$0xff]
      %v1410 = vld [vmem:[#allocation3 + $0x40] sm:$0xff]
      %v1411 = vld [vmem:[#allocation3 + $0x48] sm:$0xff]
      %v1412 = vld [vmem:[#allocation3 + $0x50] sm:$0xff]
      %v1413 = vld [vmem:[#allocation3 + $0x58] sm:$0xff]
      %v1414 = vld [vmem:[#allocation3 + $0x60] sm:$0xff]
      %v1415 = vld [vmem:[#allocation3 + $0x68] sm:$0xff]
      %v1416 = vld [vmem:[#allocation3 + $0x70] sm:$0xff]
      %v1417 = vld [vmem:[#allocation3 + $0x78] sm:$0xff]
      %v1418 = vld [vmem:[#allocation3 + $0x80] sm:$0xff]
      %v1419 = vld [vmem:[#allocation3 + $0x88] sm:$0xff]
      %v1420 = vld [vmem:[#allocation3 + $0x90] sm:$0xff]
      %v1421 = vld [vmem:[#allocation3 + $0x98] sm:$0xff]
      %v1422 = vld [vmem:[#allocation3 + $0xa0] sm:$0xff]
      %v1423 = vld [vmem:[#allocation3 + $0xa8] sm:$0xff]
      %v1424 = vld [vmem:[#allocation3 + $0xb0] sm:$0xff]
      %v1425 = vld [vmem:[#allocation3 + $0xb8] sm:$0xff]
      %v1426 = vld [vmem:[#allocation3 + $0xc0] sm:$0xff]
      %v1427 = vld [vmem:[#allocation3 + $0xc8] sm:$0xff]
      %v1428 = vld [vmem:[#allocation3 + $0xd0] sm:$0xff]
      %v1429 = vld [vmem:[#allocation3 + $0xd8] sm:$0xff]
      %v1430 = vld [vmem:[#allocation3 + $0xe0] sm:$0xff]
      %v1431 = vld [vmem:[#allocation3 + $0xe8] sm:$0xff]
      %v1432 = vld [vmem:[#allocation3 + $0xf0] sm:$0xff]
      %v1433 = vld [vmem:[#allocation3 + $0xf8] sm:$0xff]
      %v1434 = vld [vmem:[#allocation3 + $0x100] sm:$0xff]
      %v1435 = vld [vmem:[#allocation3 + $0x108] sm:$0xff]
      %v1436 = vld [vmem:[#allocation3 + $0x110] sm:$0xff]
      %v1437 = vld [vmem:[#allocation3 + $0x118] sm:$0xff]
      %v1438 = vld [vmem:[#allocation3 + $0x120] sm:$0xff]
      %v1439 = vld [vmem:[#allocation3 + $0x128] sm:$0xff]
      %v1440 = vld [vmem:[#allocation3 + $0x130] sm:$0xff]
      %v1441 = vld [vmem:[#allocation3 + $0x138] sm:$0xff]
      %v1442 = vld [vmem:[#allocation3 + $0x140] sm:$0xff]
      %v1443 = vld [vmem:[#allocation3 + $0x148] sm:$0xff]
      %v1444 = vld [vmem:[#allocation3 + $0x150] sm:$0xff]
      %v1445 = vld [vmem:[#allocation3 + $0x158] sm:$0xff]
      %v1446 = vld [vmem:[#allocation3 + $0x160] sm:$0xff]
      %v1447 = vld [vmem:[#allocation3 + $0x168] sm:$0xff]
      %v1448 = vld [vmem:[#allocation3 + $0x170] sm:$0xff]
      %v1449 = vld [vmem:[#allocation3 + $0x178] sm:$0xff]
      %v1450 = vld [vmem:[#allocation3 + $0x180] sm:$0xff]
      %v1451 = vld [vmem:[#allocation3 + $0x188] sm:$0xff]
      %v1452 = vld [vmem:[#allocation3 + $0x190] sm:$0xff]
      %v1453 = vld [vmem:[#allocation3 + $0x198] sm:$0xff]
      %v1454 = vld [vmem:[#allocation3 + $0x1a0] sm:$0xff]
      %v1455 = vld [vmem:[#allocation3 + $0x1a8] sm:$0xff]
      %v1456 = vpack.c.bf16 %v1404, %v1402
      %v1457 = vpack.c.bf16 %v1405, %v1403
      %v1458 = vpack.c.bf16 %v1408, %v1406
      %v1459 = vpack.c.bf16 %v1409, %v1407
      %v1460 = vpack.c.bf16 %v1412, %v1410
      %v1461 = vpack.c.bf16 %v1413, %v1411
      %v1462 = vpack.c.bf16 %v1416, %v1414
      %v1463 = vpack.c.bf16 %v1417, %v1415
      %v1464 = vpack.c.bf16 %v1420, %v1418
      %v1465 = vpack.c.bf16 %v1421, %v1419
      %v1466 = vpack.c.bf16 %v1424, %v1422
      %v1467 = vpack.c.bf16 %v1425, %v1423
      %v1468 = vpack.c.bf16 %v1428, %v1426
      %v1469 = vpack.c.bf16 %v1429, %v1427
      %v1470 = vpack.c.bf16 %v1432, %v1430
      %v1471 = vpack.c.bf16 %v1433, %v1431
      %v1472 = vpack.c.bf16 %v1436, %v1434
      %v1473 = vpack.c.bf16 %v1437, %v1435
      %v1474 = vpack.c.bf16 %v1440, %v1438
      %v1475 = vpack.c.bf16 %v1441, %v1439
      %v1476 = vpack.c.bf16 %v1444, %v1442
      %v1477 = vpack.c.bf16 %v1445, %v1443
      %v1478 = vpack.c.bf16 %v1448, %v1446
      %v1479 = vpack.c.bf16 %v1449, %v1447
      %v1480 = vpack.c.bf16 %v1452, %v1450
      %v1481 = vpack.c.bf16 %v1453, %v1451
      %v1482 = vpack.c.bf16 %v1454, %v1454
      %v1483 = vpack.c.bf16 %v1455, %v1455
      %v1484 = vld [vmem:[%s4] sm:$0xff]
      %v1485 = vld [vmem:[%s4 + $0x8] sm:$0xff]
      %v1486 = vld [vmem:[%s4 + $0x10] sm:$0xff]
      %v1487 = vld [vmem:[%s4 + $0x18] sm:$0xff]
      %1489 = vset.pattern.permute.xlu0 0
      %1490 = vperm.xlu0 %1489, %v1484
      %v1491 = vpop.permute.xlu0 %1490
      %1494 = vset.pattern.permute.xlu0 0
      %1495 = vperm.xlu0 %1494, %v1485
      %v1496 = vpop.permute.xlu0 %1495
      %1499 = vset.pattern.permute.xlu0 0
      %1500 = vperm.xlu0 %1499, %v1486
      %v1501 = vpop.permute.xlu0 %1500
      %1504 = vset.pattern.permute.xlu0 0
      %1505 = vperm.xlu0 %1504, %v1487
      %v1506 = vpop.permute.xlu0 %1505
      %v1512 = vunpack.c.l.b16 %v1398
      %v1513 = vunpack.c.h.b16 %v1398
      %v1514 = vunpack.c.l.b16 %v1399
      %v1515 = vunpack.c.h.b16 %v1399
      %v1516 = vunpack.c.l.b16 %v1400
      %v1517 = vunpack.c.h.b16 %v1400
      %v1518 = vunpack.c.l.b16 %v1401
      %v1519 = vunpack.c.h.b16 %v1401
      %v1520 = vpack.c.b16 %v1514, %v1512
      %v1521 = vpack.c.b16 %v1515, %v1513
      %v1522 = vpack.c.b16 %v1518, %v1516
      %v1523 = vpack.c.b16 %v1519, %v1517
      %vm1526 = vcmask 719872
      %v1528 = vsel %vm1526, %v1521, 0
      %v1531 = vsel %vm1526, %v1523, 0
      %vm1533 = vcmask 1043456
      %v1535 = vsel %vm1533, %v1482, 0
      %v1538 = vsel %vm1533, %v1483, 0
      %1540 = vmatprep.subr.bf16.mxu0 %v1457
      %1541 = vmatpush1.bf16.msra.mxu0 %v1456
      %1542 = vmatprep.subr.bf16.mxu0 %v1459
      %1543 = vmatpush1.bf16.msra.mxu0 %v1458
      %1544 = vmatprep.subr.bf16.mxu0 %v1461
      %1545 = vmatpush1.bf16.msra.mxu0 %v1460
      %1546 = vmatprep.subr.bf16.mxu0 %v1463
      %1547 = vmatpush1.bf16.msra.mxu0 %v1462
      %1548 = vmatprep.subr.bf16.mxu0 %v1465
      %1549 = vmatpush1.bf16.msra.mxu0 %v1464
      %1550 = vmatprep.subr.bf16.mxu0 %v1467
      %1551 = vmatpush1.bf16.msra.mxu0 %v1466
      %1552 = vmatprep.subr.bf16.mxu0 %v1469
      %1553 = vmatpush1.bf16.msra.mxu0 %v1468
      %1554 = vmatprep.subr.bf16.mxu0 %v1471
      %1555 = vmatpush1.bf16.msra.mxu0 %v1470
      %1556 = vmatprep.subr.bf16.mxu0 %v1473
      %1557 = vmatpush1.bf16.msra.mxu0 %v1472
      %1558 = vmatprep.subr.bf16.mxu0 %v1475
      %1559 = vmatpush1.bf16.msra.mxu0 %v1474
      %1560 = vmatprep.subr.bf16.mxu0 %v1477
      %1561 = vmatpush1.bf16.msra.mxu0 %v1476
      %1562 = vmatprep.subr.bf16.mxu0 %v1479
      %1563 = vmatpush1.bf16.msra.mxu0 %v1478
      %1564 = vmatprep.subr.bf16.mxu0 %v1481
      %1565 = vmatpush1.bf16.msra.mxu0 %v1480
      %1566 = vmatprep.subr.bf16.mxu0 %v1538
      %1567 = vmatpush1.bf16.msra.mxu0 %v1535
      %1568 = vmatprep.subr.bf16.mxu0 0
      %1569 = vmatpush1.bf16.msra.mxu0 0
      %1570 = vmatprep.subr.bf16.mxu0 0
      %1571 = vmatpush1.bf16.msra.mxu0 0
      %1572 = vmatprep.mubr.bf16.mxu0 %v1528
      %1573 = vmatmul.mubr.bf16.gmra.mrb[0].mxu0 %v1520
      %v1574 = vpop.f32.mrb[0].mxu0
      %v1575 = vadd.f32 %v1491, %v1574
      %v1576 = vpop.f32.mrb[0].mxu0
      %v1577 = vadd.f32 %v1491, %v1576
      %v1578 = vpop.f32.mrb[0].mxu0
      %v1579 = vadd.f32 %v1496, %v1578
      %v1580 = vpop.f32.mrb[0].mxu0
      %v1581 = vadd.f32 %v1496, %v1580
      %1582 = vmatprep.mubr.bf16.mxu0 %v1531
      %1583 = vmatmul.mubr.bf16.gmra.mrb[0].mxu0 %v1522
      %v1584 = vpop.f32.mrb[0].mxu0
      %v1585 = vadd.f32 %v1501, %v1584
      %v1586 = vpop.f32.mrb[0].mxu0
      %v1587 = vadd.f32 %v1501, %v1586
      %v1588 = vpop.f32.mrb[0].mxu0
      %v1589 = vadd.f32 %v1506, %v1588
      %v1590 = vpop.f32.mrb[0].mxu0
      %v1591 = vadd.f32 %v1506, %v1590
      %1592 = vdwg.mxu0
      %v1593 = vadd.f32 %v1575, %v253
      %v1594 = vadd.f32 %v1577, %v254
      %v1595 = vadd.f32 %v1579, %v255
      %v1596 = vadd.f32 %v1581, %v256
      %v1597 = vadd.f32 %v1585, %v257
      %v1598 = vadd.f32 %v1587, %v258
      %v1599 = vadd.f32 %v1589, %v259
      %v1600 = vadd.f32 %v1591, %v260
      %v1601 = vmax.f32 %v1593, 0.0
      %v1602 = vmax.f32 %v1594, 0.0
      %v1603 = vmax.f32 %v1595, 0.0
      %v1604 = vmax.f32 %v1596, 0.0
      %v1605 = vmax.f32 %v1597, 0.0
      %v1606 = vmax.f32 %v1598, 0.0
      %v1607 = vmax.f32 %v1599, 0.0
      %v1608 = vmax.f32 %v1600, 0.0
      %1609 = vst [vmem:[%s251] sm:$0xff] %v1601
      %1610 = vst [vmem:[%s251 + $0x8] sm:$0xff] %v1602
      %1611 = vst [vmem:[%s251 + $0x10] sm:$0xff] %v1603
      %1612 = vst [vmem:[%s251 + $0x18] sm:$0xff] %v1604
      %1613 = vst [vmem:[%s251 + $0x20] sm:$0xff] %v1605
      %1614 = vst [vmem:[%s251 + $0x28] sm:$0xff] %v1606
      %1615 = vst [vmem:[%s251 + $0x30] sm:$0xff] %v1607
      %1616 = vst [vmem:[%s251 + $0x38] sm:$0xff] %v1608
      %p1617 = scmp.lt.s32.totalorder %s17, 1
      %s1618 = scalar_select %p1617, %s17, 1
      %s1619 = smul.addr %s1618, 8
      %s1620 = smul.addr %s1619, 8
      %s1621 = scalar_lea.vmem %s6, %s1620
      // Predicated region
      $region45: #{fire_forward.1} parent=43 // pred_check
        %p1622 = pneg %p166
      $region46: #{fire_forward.1} parent=43 // pred_check_branch
        %1624 = sbr.rel (%p1622) target = $region48
      $region47: #{fire_forward.1} parent=43 // pred_region
        _
      $region48: #{fire_forward.1} parent=43 // pred_fallthru
        _
    $region44: #{fire_forward.1} parent=5 // pred_fallthru
      _
    %p1625 = scmp.le.s32.totalorder 2, %s12
    // Predicated region
    $region49: #{fire_forward.1} parent=5 // pred_check
      %p1626 = pneg %p1625
    $region50: #{fire_forward.1} parent=5 // pred_check_branch
      %1628 = sbr.rel (%p1626) target = $region52
    $region51: #{fire_forward.1} parent=5 // pred_region
      %s1629 = ssub.s32 %s12, 2
      // Predicated region
      $region53: #{fire_forward.1} parent=51 // pred_check
        %p1630 = pneg %p172
      $region54: #{fire_forward.1} parent=51 // pred_check_branch
        %1632 = sbr.rel (%p1630) target = $region56
      $region55: #{fire_forward.1} parent=51 // pred_region
        %p1633 = scmp.lt.s32.totalorder %s18, 1
        %s1634 = scalar_select %p1633, %s18, 1
        %s1635 = smul.addr %s1634, 8
        %s1636 = smul.addr %s1635, 8
        %s1637 = scalar_lea.vmem %s6, %s1636
      $region56: #{fire_forward.1} parent=51 // pred_fallthru
        _
    $region52: #{fire_forward.1} parent=5 // pred_fallthru
      _
  $region6: #{fire_forward.1} parent=0 // loop_footer
    %s16 = sadd.s32 1, %s12
  $region7: #{fire_forward.1} parent=0 // loop_footer_branch
    %11 = sbr.rel target = $region3
  $region8: #{fire_forward.1} parent=0 // loop_exit
    _

</llo_original>
